<compile_context>
chip_gen: v7x
topology: tpu7x:2x2x1
jax: 0.10.0
libtpu: 0.0.40
codegen_flags: <defaults>
</compile_context>

<pallas_src>
import functools

import jax
import jax.numpy as jnp
from jax.experimental import pallas as pl
from jax.experimental.pallas import tpu as pltpu

LANE = 128
SUBLANE = 8
COMPUTE_DTYPE = jnp.bfloat16  # MXU input dtype; accumulation stays f32


def _round_up(x, m):
    return (x + m - 1) // m * m


# ----------------------------------------------------------------------------
# Pallas kernel: fused  Y = relu?(X @ W + b), gridded & pipelined over M
# ----------------------------------------------------------------------------
def _linear_kernel(x_ref, w_ref, b_ref, o_ref, *, apply_relu):
    acc = jnp.dot(x_ref[...], w_ref[...], preferred_element_type=jnp.float32)
    acc = acc + b_ref[...]                       # (TM, N) + (1, N) broadcast, f32
    if apply_relu:
        acc = jnp.maximum(acc, 0.0)
    o_ref[...] = acc.astype(o_ref.dtype)


def linear_pallas(x, w, b, *, apply_relu, out_dtype=None, tm=512):
    """x: (M, K), w: (K, N) bf16, b: (N,) f32 -> (M, N) out_dtype.

    Grid over M; W and b are VMEM-resident across the grid.  TM=512 keeps
    2*(TM*K + TM*N)*2B + K*N*2B well under the 32 MiB scoped VMEM default on
    every TPU generation for this network's K (<= a few thousand).
    """
    M, K = x.shape
    K2, N = w.shape
    assert K == K2 and b.shape == (N,)
    out_dtype = out_dtype or jnp.float32

    TM = min(tm, _round_up(M, SUBLANE))
    M_pad = _round_up(M, TM)
    if M_pad != M:                                # keep tiles uniform / unmasked
        x = jnp.pad(x, ((0, M_pad - M), (0, 0)))

    y = pl.pallas_call(
        functools.partial(_linear_kernel, apply_relu=apply_relu),
        out_shape=jax.ShapeDtypeStruct((M_pad, N), out_dtype),
        grid=(M_pad // TM,),
        in_specs=[
            pl.BlockSpec((TM, K), lambda i: (i, 0)),
            pl.BlockSpec((K, N), lambda i: (0, 0)),
            pl.BlockSpec((1, N), lambda i: (0, 0)),
        ],
        out_specs=pl.BlockSpec((TM, N), lambda i: (i, 0)),
        compiler_params=pltpu.CompilerParams(
            dimension_semantics=("parallel",)),   # v7x: shard M over both TCs
    )(x.astype(COMPUTE_DTYPE), w, b.reshape(1, N).astype(jnp.float32))
    return y[:M] if M_pad != M else y


# ----------------------------------------------------------------------------
# Pallas kernel: fused FC head  q = (relu(relu(x@W1+b1)@W2+b2))@W3+b3
# ----------------------------------------------------------------------------
def _fc_head_kernel(x_ref, w1_ref, b1_ref, w2_ref, b2_ref, w3_ref, b3_ref, o_ref):
    h = jnp.dot(x_ref[...], w1_ref[...], preferred_element_type=jnp.float32)
    h = jnp.maximum(h + b1_ref[...], 0.0)
    h = jnp.dot(h.astype(w2_ref.dtype), w2_ref[...],
                preferred_element_type=jnp.float32)
    h = jnp.maximum(h + b2_ref[...], 0.0)
    q = jnp.dot(h.astype(w3_ref.dtype), w3_ref[...],
                preferred_element_type=jnp.float32)
    o_ref[...] = (q + b3_ref[...]).astype(o_ref.dtype)


def fc_head_pallas(x, w1, b1, w2, b2, w3, b3, *, tm=256):
    """x: (B, K1) -> (B, N_pad) f32; all three GEMMs stay in VMEM."""
    M, K1 = x.shape
    H1, H2, NP = w1.shape[1], w2.shape[1], w3.shape[1]
    TM = min(tm, _round_up(M, SUBLANE))
    M_pad = _round_up(M, TM)
    if M_pad != M:
        x = jnp.pad(x, ((0, M_pad - M), (0, 0)))

    q = pl.pallas_call(
        _fc_head_kernel,
        out_shape=jax.ShapeDtypeStruct((M_pad, NP), jnp.float32),
        grid=(M_pad // TM,),
        in_specs=[
            pl.BlockSpec((TM, K1), lambda i: (i, 0)),
            pl.BlockSpec((K1, H1), lambda i: (0, 0)),
            pl.BlockSpec((1, H1), lambda i: (0, 0)),
            pl.BlockSpec((H1, H2), lambda i: (0, 0)),
            pl.BlockSpec((1, H2), lambda i: (0, 0)),
            pl.BlockSpec((H2, NP), lambda i: (0, 0)),
            pl.BlockSpec((1, NP), lambda i: (0, 0)),
        ],
        out_specs=pl.BlockSpec((TM, NP), lambda i: (i, 0)),
        compiler_params=pltpu.CompilerParams(
            dimension_semantics=("parallel",)),
    )(x.astype(COMPUTE_DTYPE), w1, b1.reshape(1, H1).astype(jnp.float32),
      w2, b2.reshape(1, H2).astype(jnp.float32),
      w3, b3.reshape(1, NP).astype(jnp.float32))
    return q[:M] if M_pad != M else q


# ----------------------------------------------------------------------------
# Glue: NHWC im2col (channel-minor) feeding the fused matmul kernel
# ----------------------------------------------------------------------------
def _im2col_nhwc(x, k, stride):
    """x: (B, H, W, C) -> patches (B*Ho*Wo, k*k*C) with (kh,kw)-major, C-minor."""
    B, H, W, C = x.shape
    Ho = (H - k) // stride + 1
    Wo = (W - k) // stride + 1
    cols = []
    for i in range(k):
        for j in range(k):
            cols.append(x[:, i:i + stride * Ho:stride,
                          j:j + stride * Wo:stride, :])       # (B, Ho, Wo, C)
    p = jnp.concatenate(cols, axis=-1)                        # (B, Ho, Wo, k*k*C)
    return p.reshape(B * Ho * Wo, k * k * C), Ho, Wo


def _conv2d_relu_nhwc(x, w_mat, b, *, k, stride, tm=512):
    """x: (B,H,W,Cin), w_mat: (k*k*Cin, Cout_pad) -> relu(conv(x)) NHWC bf16."""
    B = x.shape[0]
    patches, Ho, Wo = _im2col_nhwc(x, k, stride)
    y = linear_pallas(patches, w_mat, b, apply_relu=True,
                      out_dtype=COMPUTE_DTYPE, tm=tm)          # (B*Ho*Wo, Cout_pad)
    return y.reshape(B, Ho, Wo, w_mat.shape[1])                # stays NHWC


# ----------------------------------------------------------------------------
# Parameters: synthetic torch-layout init + one-time conversion to TPU layout
# ----------------------------------------------------------------------------
def conv_out_spatial(h):
    h1 = (h - 8) // 4 + 1
    h2 = (h1 - 4) // 2 + 1
    h3 = (h2 - 3) // 1 + 1
    return h3


def init_torch_params(key, input_dim, output_dim):
    """Synthetic params in PyTorch layouts: conv (Cout,Cin,kh,kw), linear (out,in)."""
    C, H, W = input_dim
    Ho, Wo = conv_out_spatial(H), conv_out_spatial(W)
    fc_in = 64 * Ho * Wo                                       # == ConvDQN.feature_size()

    def _init(k, shape, fan_in):
        return (jax.random.normal(k, shape, jnp.float32)
                / jnp.sqrt(jnp.float32(fan_in)))

    ks = jax.random.split(key, 12)
    params = {
        "c1_w": _init(ks[0], (32, C, 8, 8), C * 64),
        "c1_b": _init(ks[1], (32,), C * 64),
        "c2_w": _init(ks[2], (64, 32, 4, 4), 32 * 16),
        "c2_b": _init(ks[3], (64,), 32 * 16),
        "c3_w": _init(ks[4], (64, 64, 3, 3), 64 * 9),
        "c3_b": _init(ks[5], (64,), 64 * 9),
        "f1_w": _init(ks[6], (128, fc_in), fc_in),
        "f1_b": _init(ks[7], (128,), fc_in),
        "f2_w": _init(ks[8], (256, 128), 128),
        "f2_b": _init(ks[9], (256,), 128),
        "f3_w": _init(ks[10], (output_dim, 256), 256),
        "f3_b": _init(ks[11], (output_dim,), 256),
    }
    return params, (Ho, Wo)


def _prep_conv(w, b, cin_pad, cout_pad):
    """torch (Cout,Cin,kh,kw) -> (kh*kw*Cin_pad, Cout_pad) bf16 matching NHWC im2col."""
    Cout, Cin, kh, kw = w.shape
    wm = jnp.transpose(w, (2, 3, 1, 0))                        # (kh, kw, Cin, Cout)
    wm = jnp.pad(wm, ((0, 0), (0, 0), (0, cin_pad - Cin), (0, cout_pad - Cout)))
    wm = wm.reshape(kh * kw * cin_pad, cout_pad).astype(COMPUTE_DTYPE)
    bm = jnp.pad(b, (0, cout_pad - Cout)).astype(jnp.float32)
    return wm, bm


def prepare_params(tp, input_dim, output_dim, conv_hw):
    C = input_dim[0]
    Ho, Wo = conv_hw
    CP = LANE                      # all conv output channels padded to 128 (lane-dense)

    c1_w, c1_b = _prep_conv(tp["c1_w"], tp["c1_b"], C, CP)
    c2_w, c2_b = _prep_conv(tp["c2_w"], tp["c2_b"], CP, CP)
    c3_w, c3_b = _prep_conv(tp["c3_w"], tp["c3_b"], CP, CP)

    # fc1 consumes the torch NCHW flatten of the (64, Ho, Wo) features; our
    # kernel flatten is NHWC with channels padded to CP -> permute + pad the
    # weight rows once here instead of transposing activations every forward.
    f1 = tp["f1_w"].reshape(128, 64, Ho, Wo)                   # (N, C, H, W)
    f1 = jnp.transpose(f1, (2, 3, 1, 0))                       # (H, W, C, N)
    f1 = jnp.pad(f1, ((0, 0), (0, 0), (0, CP - 64), (0, 0)))
    f1 = f1.reshape(Ho * Wo * CP, 128).astype(COMPUTE_DTYPE)

    f2 = jnp.transpose(tp["f2_w"]).astype(COMPUTE_DTYPE)       # (128, 256)

    NP = _round_up(max(output_dim, LANE), LANE)                # lane-dense final store
    f3 = jnp.transpose(tp["f3_w"])                             # (256, output_dim)
    f3 = jnp.pad(f3, ((0, 0), (0, NP - output_dim))).astype(COMPUTE_DTYPE)
    f3_b = jnp.pad(tp["f3_b"], (0, NP - output_dim)).astype(jnp.float32)

    return {
        "c1_w": c1_w, "c1_b": c1_b,
        "c2_w": c2_w, "c2_b": c2_b,
        "c3_w": c3_w, "c3_b": c3_b,
        "f1_w": f1, "f1_b": tp["f1_b"].astype(jnp.float32),
        "f2_w": f2, "f2_b": tp["f2_b"].astype(jnp.float32),
        "f3_w": f3, "f3_b": f3_b,
    }


# ----------------------------------------------------------------------------
# ConvDQN forward
# ----------------------------------------------------------------------------
@functools.partial(jax.jit, static_argnames=("output_dim",))
def conv_dqn_forward(params, state, *, output_dim):
    """state: (B, C, H, W) f32 NCHW (torch convention) -> qvals (B, output_dim) f32."""
    x = jnp.transpose(state, (0, 2, 3, 1)).astype(COMPUTE_DTYPE)   # NHWC once, bf16
    x = _conv2d_relu_nhwc(x, params["c1_w"], params["c1_b"], k=8, stride=4)
    x = _conv2d_relu_nhwc(x, params["c2_w"], params["c2_b"], k=4, stride=2)
    x = _conv2d_relu_nhwc(x, params["c3_w"], params["c3_b"], k=3, stride=1)
    B = x.shape[0]
    feats = x.reshape(B, -1)       # NHWC(+pad) flatten; fc1 weight already permuted
    q = fc_head_pallas(feats, params["f1_w"], params["f1_b"],
                       params["f2_w"], params["f2_b"],
                       params["f3_w"], params["f3_b"])
    return q[:, :output_dim]


if __name__ == "__main__":
    # Smallest spatial size admitted by the conv stack is 36 (-> 8 -> 3 -> 1).
    input_dim = (4, 36, 36)   # (C, H, W)
    output_dim = 6
    batch = 2

    key = jax.random.PRNGKey(0)
    pkey, xkey = jax.random.split(key)
    torch_params, conv_hw = init_torch_params(pkey, input_dim, output_dim)
    params = prepare_params(torch_params, input_dim, output_dim, conv_hw)
    state = jax.random.normal(xkey, (batch, *input_dim), jnp.float32)

    qvals = conv_dqn_forward(params, state, output_dim=output_dim)
    qvals = jax.block_until_ready(qvals)
    assert qvals.shape == (batch, output_dim), qvals.shape
    assert qvals.dtype == jnp.float32
    assert bool(jnp.all(jnp.isfinite(qvals)))

    print("KERNEL_OK")
</pallas_src>

<mosaic_0001>
module attributes {stable_mosaic.version = 11 : i64} {
  func.func @_linear_kernel(%arg0: i32, %arg1: memref<128x256xbf16, #tpu.memory_space<vmem>>, %arg2: memref<256x128xbf16, #tpu.memory_space<vmem>>, %arg3: memref<1x128xf32, #tpu.memory_space<vmem>>, %arg4: memref<128x128xbf16, #tpu.memory_space<vmem>>) attributes {dimension_semantics = [#tpu.dimension_semantics<parallel>], iteration_bounds = array<i64: 1>, scalar_prefetch = 0 : i64, scratch_operands = 0 : i64, tpu.core_type = #tpu.core_type<tc>, window_params = [{transform_indices = @transform_0, window_bounds = array<i64: 128, 256>}, {pipeline_mode = #tpu.pipeline_mode<synchronous>, transform_indices = @transform_1, window_bounds = array<i64: 256, 128>}, {pipeline_mode = #tpu.pipeline_mode<synchronous>, transform_indices = @transform_2, window_bounds = array<i64: 1, 128>}, {transform_indices = @transform_3, window_bounds = array<i64: 128, 128>}]} {
    %c0 = arith.constant 0 : index
    %c0_0 = arith.constant 0 : index
    %0 = vector.load %arg1[%c0, %c0_0] : memref<128x256xbf16, #tpu.memory_space<vmem>>, vector<128x256xbf16>
    %c0_1 = arith.constant 0 : index
    %c0_2 = arith.constant 0 : index
    %1 = vector.load %arg2[%c0_1, %c0_2] : memref<256x128xbf16, #tpu.memory_space<vmem>>, vector<256x128xbf16>
    %cst = arith.constant dense<0.000000e+00> : vector<128x128xf32>
    %2 = tpu.matmul %0, %1, %cst {dimension_numbers = #tpu.dot_dimension_numbers<[1], [0], [0], [1], [0, 0, 1, 1], [], []>} : vector<128x256xbf16>, vector<256x128xbf16>, vector<128x128xf32> -> vector<128x128xf32>
    %c0_3 = arith.constant 0 : index
    %c0_4 = arith.constant 0 : index
    %3 = vector.load %arg3[%c0_3, %c0_4] : memref<1x128xf32, #tpu.memory_space<vmem>>, vector<1x128xf32>
    %4 = vector.broadcast %3 : vector<1x128xf32> to vector<128x128xf32>
    %5 = arith.addf %2, %4 : vector<128x128xf32>
    %cst_5 = arith.constant 0.000000e+00 : f32
    %6 = vector.broadcast %cst_5 : f32 to vector<128x128xf32>
    %7 = arith.maximumf %5, %6 : vector<128x128xf32>
    %8 = arith.truncf %7 : vector<128x128xf32> to vector<128x128xbf16>
    %c0_6 = arith.constant 0 : index
    %c0_7 = arith.constant 0 : index
    %9 = vector.load %arg4[%c0_6, %c0_7] : memref<128x128xbf16, #tpu.memory_space<vmem>>, vector<128x128xbf16>
    tpu.vector_store %arg4[%c0_6, %c0_7], %8 {strides = array<i32>} : memref<128x128xbf16, #tpu.memory_space<vmem>>, vector<128x128xbf16>,
    return
  }
  func.func @transform_0(%arg0: i32) -> (i32, i32) {
    %c0_i32 = arith.constant 0 : i32
    %c0_i32_0 = arith.constant 0 : i32
    return %arg0, %c0_i32 : i32, i32
  }
  func.func @transform_1(%arg0: i32) -> (i32, i32) {
    %c0_i32 = arith.constant 0 : i32
    %c0_i32_0 = arith.constant 0 : i32
    %c0_i32_1 = arith.constant 0 : i32
    return %c0_i32, %c0_i32_0 : i32, i32
  }
  func.func @transform_2(%arg0: i32) -> (i32, i32) {
    %c0_i32 = arith.constant 0 : i32
    %c0_i32_0 = arith.constant 0 : i32
    %c0_i32_1 = arith.constant 0 : i32
    return %c0_i32, %c0_i32_0 : i32, i32
  }
  func.func @transform_3(%arg0: i32) -> (i32, i32) {
    %c0_i32 = arith.constant 0 : i32
    %c0_i32_0 = arith.constant 0 : i32
    return %arg0, %c0_i32 : i32, i32
  }
}

module attributes {stable_mosaic.version = 11 : i64} {
  func.func @_linear_kernel(%arg0: i32, %arg1: memref<24x2048xbf16, #tpu.memory_space<vmem>>, %arg2: memref<2048x128xbf16, #tpu.memory_space<vmem>>, %arg3: memref<1x128xf32, #tpu.memory_space<vmem>>, %arg4: memref<24x128xbf16, #tpu.memory_space<vmem>>) attributes {dimension_semantics = [#tpu.dimension_semantics<parallel>], iteration_bounds = array<i64: 1>, scalar_prefetch = 0 : i64, scratch_operands = 0 : i64, tpu.core_type = #tpu.core_type<tc>, window_params = [{transform_indices = @transform_0, window_bounds = array<i64: 24, 2048>}, {pipeline_mode = #tpu.pipeline_mode<synchronous>, transform_indices = @transform_1, window_bounds = array<i64: 2048, 128>}, {pipeline_mode = #tpu.pipeline_mode<synchronous>, transform_indices = @transform_2, window_bounds = array<i64: 1, 128>}, {transform_indices = @transform_3, window_bounds = array<i64: 24, 128>}]} {
    %c0 = arith.constant 0 : index
    %c0_0 = arith.constant 0 : index
    %0 = vector.load %arg1[%c0, %c0_0] : memref<24x2048xbf16, #tpu.memory_space<vmem>>, vector<24x2048xbf16>
    %c0_1 = arith.constant 0 : index
    %c0_2 = arith.constant 0 : index
    %1 = vector.load %arg2[%c0_1, %c0_2] : memref<2048x128xbf16, #tpu.memory_space<vmem>>, vector<2048x128xbf16>
    %cst = arith.constant dense<0.000000e+00> : vector<24x128xf32>
    %2 = tpu.matmul %0, %1, %cst {dimension_numbers = #tpu.dot_dimension_numbers<[1], [0], [0], [1], [0, 0, 1, 1], [], []>} : vector<24x2048xbf16>, vector<2048x128xbf16>, vector<24x128xf32> -> vector<24x128xf32>
    %c0_3 = arith.constant 0 : index
    %c0_4 = arith.constant 0 : index
    %3 = vector.load %arg3[%c0_3, %c0_4] : memref<1x128xf32, #tpu.memory_space<vmem>>, vector<1x128xf32>
    %4 = vector.broadcast %3 : vector<1x128xf32> to vector<24x128xf32>
    %5 = arith.addf %2, %4 : vector<24x128xf32>
    %cst_5 = arith.constant 0.000000e+00 : f32
    %6 = vector.broadcast %cst_5 : f32 to vector<24x128xf32>
    %7 = arith.maximumf %5, %6 : vector<24x128xf32>
    %8 = arith.truncf %7 : vector<24x128xf32> to vector<24x128xbf16>
    %c0_6 = arith.constant 0 : index
    %c0_7 = arith.constant 0 : index
    %9 = vector.load %arg4[%c0_6, %c0_7] : memref<24x128xbf16, #tpu.memory_space<vmem>>, vector<24x128xbf16>
    tpu.vector_store %arg4[%c0_6, %c0_7], %8 {strides = array<i32>} : memref<24x128xbf16, #tpu.memory_space<vmem>>, vector<24x128xbf16>,
    return
  }
  func.func @transform_0(%arg0: i32) -> (i32, i32) {
    %c0_i32 = arith.constant 0 : i32
    %c0_i32_0 = arith.constant 0 : i32
    return %arg0, %c0_i32 : i32, i32
  }
  func.func @transform_1(%arg0: i32) -> (i32, i32) {
    %c0_i32 = arith.constant 0 : i32
    %c0_i32_0 = arith.constant 0 : i32
    %c0_i32_1 = arith.constant 0 : i32
    return %c0_i32, %c0_i32_0 : i32, i32
  }
  func.func @transform_2(%arg0: i32) -> (i32, i32) {
    %c0_i32 = arith.constant 0 : i32
    %c0_i32_0 = arith.constant 0 : i32
    %c0_i32_1 = arith.constant 0 : i32
    return %c0_i32, %c0_i32_0 : i32, i32
  }
  func.func @transform_3(%arg0: i32) -> (i32, i32) {
    %c0_i32 = arith.constant 0 : i32
    %c0_i32_0 = arith.constant 0 : i32
    return %arg0, %c0_i32 : i32, i32
  }
}

module attributes {stable_mosaic.version = 11 : i64} {
  func.func @_linear_kernel(%arg0: i32, %arg1: memref<8x1152xbf16, #tpu.memory_space<vmem>>, %arg2: memref<1152x128xbf16, #tpu.memory_space<vmem>>, %arg3: memref<1x128xf32, #tpu.memory_space<vmem>>, %arg4: memref<8x128xbf16, #tpu.memory_space<vmem>>) attributes {dimension_semantics = [#tpu.dimension_semantics<parallel>], iteration_bounds = array<i64: 1>, scalar_prefetch = 0 : i64, scratch_operands = 0 : i64, tpu.core_type = #tpu.core_type<tc>, window_params = [{transform_indices = @transform_0, window_bounds = array<i64: 8, 1152>}, {pipeline_mode = #tpu.pipeline_mode<synchronous>, transform_indices = @transform_1, window_bounds = array<i64: 1152, 128>}, {pipeline_mode = #tpu.pipeline_mode<synchronous>, transform_indices = @transform_2, window_bounds = array<i64: 1, 128>}, {transform_indices = @transform_3, window_bounds = array<i64: 8, 128>}]} {
    %c0 = arith.constant 0 : index
    %c0_0 = arith.constant 0 : index
    %0 = vector.load %arg1[%c0, %c0_0] : memref<8x1152xbf16, #tpu.memory_space<vmem>>, vector<8x1152xbf16>
    %c0_1 = arith.constant 0 : index
    %c0_2 = arith.constant 0 : index
    %1 = vector.load %arg2[%c0_1, %c0_2] : memref<1152x128xbf16, #tpu.memory_space<vmem>>, vector<1152x128xbf16>
    %cst = arith.constant dense<0.000000e+00> : vector<8x128xf32>
    %2 = tpu.matmul %0, %1, %cst {dimension_numbers = #tpu.dot_dimension_numbers<[1], [0], [0], [1], [0, 0, 1, 1], [], []>} : vector<8x1152xbf16>, vector<1152x128xbf16>, vector<8x128xf32> -> vector<8x128xf32>
    %c0_3 = arith.constant 0 : index
    %c0_4 = arith.constant 0 : index
    %3 = vector.load %arg3[%c0_3, %c0_4] : memref<1x128xf32, #tpu.memory_space<vmem>>, vector<1x128xf32>
    %4 = vector.broadcast %3 : vector<1x128xf32> to vector<8x128xf32>
    %5 = arith.addf %2, %4 : vector<8x128xf32>
    %cst_5 = arith.constant 0.000000e+00 : f32
    %6 = vector.broadcast %cst_5 : f32 to vector<8x128xf32>
    %7 = arith.maximumf %5, %6 : vector<8x128xf32>
    %8 = arith.truncf %7 : vector<8x128xf32> to vector<8x128xbf16>
    %c0_6 = arith.constant 0 : index
    %c0_7 = arith.constant 0 : index
    %9 = vector.load %arg4[%c0_6, %c0_7] : memref<8x128xbf16, #tpu.memory_space<vmem>>, vector<8x128xbf16>
    tpu.vector_store %arg4[%c0_6, %c0_7], %8 {strides = array<i32>} : memref<8x128xbf16, #tpu.memory_space<vmem>>, vector<8x128xbf16>,
    return
  }
  func.func @transform_0(%arg0: i32) -> (i32, i32) {
    %c0_i32 = arith.constant 0 : i32
    %c0_i32_0 = arith.constant 0 : i32
    return %arg0, %c0_i32 : i32, i32
  }
  func.func @transform_1(%arg0: i32) -> (i32, i32) {
    %c0_i32 = arith.constant 0 : i32
    %c0_i32_0 = arith.constant 0 : i32
    %c0_i32_1 = arith.constant 0 : i32
    return %c0_i32, %c0_i32_0 : i32, i32
  }
  func.func @transform_2(%arg0: i32) -> (i32, i32) {
    %c0_i32 = arith.constant 0 : i32
    %c0_i32_0 = arith.constant 0 : i32
    %c0_i32_1 = arith.constant 0 : i32
    return %c0_i32, %c0_i32_0 : i32, i32
  }
  func.func @transform_3(%arg0: i32) -> (i32, i32) {
    %c0_i32 = arith.constant 0 : i32
    %c0_i32_0 = arith.constant 0 : i32
    return %arg0, %c0_i32 : i32, i32
  }
}

module attributes {stable_mosaic.version = 11 : i64} {
  func.func @_fc_head_kernel(%arg0: i32, %arg1: memref<8x128xbf16, #tpu.memory_space<vmem>>, %arg2: memref<128x128xbf16, #tpu.memory_space<vmem>>, %arg3: memref<1x128xf32, #tpu.memory_space<vmem>>, %arg4: memref<128x256xbf16, #tpu.memory_space<vmem>>, %arg5: memref<1x256xf32, #tpu.memory_space<vmem>>, %arg6: memref<256x128xbf16, #tpu.memory_space<vmem>>, %arg7: memref<1x128xf32, #tpu.memory_space<vmem>>, %arg8: memref<8x128xf32, #tpu.memory_space<vmem>>) attributes {dimension_semantics = [#tpu.dimension_semantics<parallel>], iteration_bounds = array<i64: 1>, scalar_prefetch = 0 : i64, scratch_operands = 0 : i64, tpu.core_type = #tpu.core_type<tc>, window_params = [{transform_indices = @transform_0, window_bounds = array<i64: 8, 128>}, {pipeline_mode = #tpu.pipeline_mode<synchronous>, transform_indices = @transform_1, window_bounds = array<i64: 128, 128>}, {pipeline_mode = #tpu.pipeline_mode<synchronous>, transform_indices = @transform_2, window_bounds = array<i64: 1, 128>}, {pipeline_mode = #tpu.pipeline_mode<synchronous>, transform_indices = @transform_3, window_bounds = array<i64: 128, 256>}, {pipeline_mode = #tpu.pipeline_mode<synchronous>, transform_indices = @transform_4, window_bounds = array<i64: 1, 256>}, {pipeline_mode = #tpu.pipeline_mode<synchronous>, transform_indices = @transform_5, window_bounds = array<i64: 256, 128>}, {pipeline_mode = #tpu.pipeline_mode<synchronous>, transform_indices = @transform_6, window_bounds = array<i64: 1, 128>}, {transform_indices = @transform_7, window_bounds = array<i64: 8, 128>}]} {
    %c0 = arith.constant 0 : index
    %c0_0 = arith.constant 0 : index
    %0 = vector.load %arg1[%c0, %c0_0] : memref<8x128xbf16, #tpu.memory_space<vmem>>, vector<8x128xbf16>
    %c0_1 = arith.constant 0 : index
    %c0_2 = arith.constant 0 : index
    %1 = vector.load %arg2[%c0_1, %c0_2] : memref<128x128xbf16, #tpu.memory_space<vmem>>, vector<128x128xbf16>
    %cst = arith.constant dense<0.000000e+00> : vector<8x128xf32>
    %2 = tpu.matmul %0, %1, %cst {dimension_numbers = #tpu.dot_dimension_numbers<[1], [0], [0], [1], [0, 0, 1, 1], [], []>} : vector<8x128xbf16>, vector<128x128xbf16>, vector<8x128xf32> -> vector<8x128xf32>
    %c0_3 = arith.constant 0 : index
    %c0_4 = arith.constant 0 : index
    %3 = vector.load %arg3[%c0_3, %c0_4] : memref<1x128xf32, #tpu.memory_space<vmem>>, vector<1x128xf32>
    %4 = vector.broadcast %3 : vector<1x128xf32> to vector<8x128xf32>
    %5 = arith.addf %2, %4 : vector<8x128xf32>
    %cst_5 = arith.constant 0.000000e+00 : f32
    %6 = vector.broadcast %cst_5 : f32 to vector<8x128xf32>
    %7 = arith.maximumf %5, %6 : vector<8x128xf32>
    %8 = arith.truncf %7 : vector<8x128xf32> to vector<8x128xbf16>
    %c0_6 = arith.constant 0 : index
    %c0_7 = arith.constant 0 : index
    %9 = vector.load %arg4[%c0_6, %c0_7] : memref<128x256xbf16, #tpu.memory_space<vmem>>, vector<128x256xbf16>
    %cst_8 = arith.constant dense<0.000000e+00> : vector<8x256xf32>
    %10 = tpu.matmul %8, %9, %cst_8 {dimension_numbers = #tpu.dot_dimension_numbers<[1], [0], [0], [1], [0, 0, 1, 1], [], []>} : vector<8x128xbf16>, vector<128x256xbf16>, vector<8x256xf32> -> vector<8x256xf32>
    %c0_9 = arith.constant 0 : index
    %c0_10 = arith.constant 0 : index
    %11 = vector.load %arg5[%c0_9, %c0_10] : memref<1x256xf32, #tpu.memory_space<vmem>>, vector<1x256xf32>
    %12 = vector.broadcast %11 : vector<1x256xf32> to vector<8x256xf32>
    %13 = arith.addf %10, %12 : vector<8x256xf32>
    %cst_11 = arith.constant 0.000000e+00 : f32
    %14 = vector.broadcast %cst_11 : f32 to vector<8x256xf32>
    %15 = arith.maximumf %13, %14 : vector<8x256xf32>
    %16 = arith.truncf %15 : vector<8x256xf32> to vector<8x256xbf16>
    %c0_12 = arith.constant 0 : index
    %c0_13 = arith.constant 0 : index
    %17 = vector.load %arg6[%c0_12, %c0_13] : memref<256x128xbf16, #tpu.memory_space<vmem>>, vector<256x128xbf16>
    %cst_14 = arith.constant dense<0.000000e+00> : vector<8x128xf32>
    %18 = tpu.matmul %16, %17, %cst_14 {dimension_numbers = #tpu.dot_dimension_numbers<[1], [0], [0], [1], [0, 0, 1, 1], [], []>} : vector<8x256xbf16>, vector<256x128xbf16>, vector<8x128xf32> -> vector<8x128xf32>
    %c0_15 = arith.constant 0 : index
    %c0_16 = arith.constant 0 : index
    %19 = vector.load %arg7[%c0_15, %c0_16] : memref<1x128xf32, #tpu.memory_space<vmem>>, vector<1x128xf32>
    %20 = vector.broadcast %19 : vector<1x128xf32> to vector<8x128xf32>
    %21 = arith.addf %18, %20 : vector<8x128xf32>
    %c0_17 = arith.constant 0 : index
    %c0_18 = arith.constant 0 : index
    %22 = vector.load %arg8[%c0_17, %c0_18] : memref<8x128xf32, #tpu.memory_space<vmem>>, vector<8x128xf32>
    tpu.vector_store %arg8[%c0_17, %c0_18], %21 {strides = array<i32>} : memref<8x128xf32, #tpu.memory_space<vmem>>, vector<8x128xf32>,
    return
  }
  func.func @transform_0(%arg0: i32) -> (i32, i32) {
    %c0_i32 = arith.constant 0 : i32
    %c0_i32_0 = arith.constant 0 : i32
    return %arg0, %c0_i32 : i32, i32
  }
  func.func @transform_1(%arg0: i32) -> (i32, i32) {
    %c0_i32 = arith.constant 0 : i32
    %c0_i32_0 = arith.constant 0 : i32
    %c0_i32_1 = arith.constant 0 : i32
    return %c0_i32, %c0_i32_0 : i32, i32
  }
  func.func @transform_2(%arg0: i32) -> (i32, i32) {
    %c0_i32 = arith.constant 0 : i32
    %c0_i32_0 = arith.constant 0 : i32
    %c0_i32_1 = arith.constant 0 : i32
    return %c0_i32, %c0_i32_0 : i32, i32
  }
  func.func @transform_3(%arg0: i32) -> (i32, i32) {
    %c0_i32 = arith.constant 0 : i32
    %c0_i32_0 = arith.constant 0 : i32
    %c0_i32_1 = arith.constant 0 : i32
    return %c0_i32, %c0_i32_0 : i32, i32
  }
  func.func @transform_4(%arg0: i32) -> (i32, i32) {
    %c0_i32 = arith.constant 0 : i32
    %c0_i32_0 = arith.constant 0 : i32
    %c0_i32_1 = arith.constant 0 : i32
    return %c0_i32, %c0_i32_0 : i32, i32
  }
  func.func @transform_5(%arg0: i32) -> (i32, i32) {
    %c0_i32 = arith.constant 0 : i32
    %c0_i32_0 = arith.constant 0 : i32
    %c0_i32_1 = arith.constant 0 : i32
    return %c0_i32, %c0_i32_0 : i32, i32
  }
  func.func @transform_6(%arg0: i32) -> (i32, i32) {
    %c0_i32 = arith.constant 0 : i32
    %c0_i32_0 = arith.constant 0 : i32
    %c0_i32_1 = arith.constant 0 : i32
    return %c0_i32, %c0_i32_0 : i32, i32
  }
  func.func @transform_7(%arg0: i32) -> (i32, i32) {
    %c0_i32 = arith.constant 0 : i32
    %c0_i32_0 = arith.constant 0 : i32
    return %arg0, %c0_i32 : i32, i32
  }
}

</mosaic_0001>

<llo_original>
// kernel: conv_dqn_forward.4
$region0: #{conv_dqn_forward.4}
  #allocation0 [shape = 'u32[]', space=smem, size = 0x4, offset = 0x4, fixed_abs, tag = 'smem constant byte address 0x4 - core index']
  #allocation1 [shape = 'u32[144,128]{1,0:T(1,128)}', space=vmem, size = 0x12000, scoped, tag = 'internal scratch']
  %s0 = inlined_call_operand.vmem [shape: bf16[128,256], index: 0, kind: input, shape index: {}]
  %s1 = inlined_call_operand.vmem [shape: bf16[256,128], index: 1, kind: input, shape index: {}]
  %s2 = inlined_call_operand.vmem [shape: f32[1,128], index: 2, kind: input, shape index: {}]
  %s3 = inlined_call_operand.vmem [shape: bf16[128,128], index: 3, kind: output, shape index: {}]
  %s4 = sld [smem:[#allocation0]]
  $region22: #{conv_dqn_forward.4} parent=0
    _
  %s6 = ssub.s32 1, %s4
  %s7 = scalar_select 0, %s6, %s4
  // Predicated region
  $region2: #{conv_dqn_forward.4} parent=0 // pred_check
    _
  $region3: #{conv_dqn_forward.4} parent=0 // pred_check_branch
    %9 = sbr.rel (0) target = $region5
  $region4: #{conv_dqn_forward.4} parent=0 // pred_region
    _
  $region5: #{conv_dqn_forward.4} parent=0 // pred_fallthru
    _
  // Predicated region
  $region6: #{conv_dqn_forward.4} parent=0 // pred_check
    _
  $region7: #{conv_dqn_forward.4} parent=0 // pred_check_branch
    %11 = sbr.rel (0) target = $region9
  $region8: #{conv_dqn_forward.4} parent=0 // pred_region
    _
  $region9: #{conv_dqn_forward.4} parent=0 // pred_fallthru
    _
  // Predicated region
  $region10: #{conv_dqn_forward.4} parent=0 // pred_check
    _
  $region11: #{conv_dqn_forward.4} parent=0 // pred_check_branch
    %13 = sbr.rel (0) target = $region13
  $region12: #{conv_dqn_forward.4} parent=0 // pred_region
    _
  $region13: #{conv_dqn_forward.4} parent=0 // pred_fallthru
    _
  %v15 = vld [vmem:[%s0] sm:$0xff]
  %v16 = vld [vmem:[%s0 + $0x8] sm:$0xff]
  %v17 = vld [vmem:[%s0 + $0x10] sm:$0xff]
  %v18 = vld [vmem:[%s0 + $0x18] sm:$0xff]
  %v19 = vld [vmem:[%s0 + $0x20] sm:$0xff]
  %v20 = vld [vmem:[%s0 + $0x28] sm:$0xff]
  %v21 = vld [vmem:[%s0 + $0x30] sm:$0xff]
  %v22 = vld [vmem:[%s0 + $0x38] sm:$0xff]
  %v23 = vld [vmem:[%s0 + $0x40] sm:$0xff]
  %v24 = vld [vmem:[%s0 + $0x48] sm:$0xff]
  %v25 = vld [vmem:[%s0 + $0x50] sm:$0xff]
  %v26 = vld [vmem:[%s0 + $0x58] sm:$0xff]
  %v27 = vld [vmem:[%s0 + $0x60] sm:$0xff]
  %v28 = vld [vmem:[%s0 + $0x68] sm:$0xff]
  %v29 = vld [vmem:[%s0 + $0x70] sm:$0xff]
  %v30 = vld [vmem:[%s0 + $0x78] sm:$0xff]
  %v31 = vld [vmem:[%s1] sm:$0xf]
  %v32 = vld [vmem:[%s1 + $0x4] sm:$0xf]
  %v33 = vld [vmem:[%s1 + $0x8] sm:$0xf]
  %v34 = vld [vmem:[%s1 + $0xc] sm:$0xf]
  %v35 = vld [vmem:[%s1 + $0x10] sm:$0xf]
  %v36 = vld [vmem:[%s1 + $0x14] sm:$0xf]
  %v37 = vld [vmem:[%s1 + $0x18] sm:$0xf]
  %v38 = vld [vmem:[%s1 + $0x1c] sm:$0xf]
  %v39 = vld [vmem:[%s1 + $0x20] sm:$0xf]
  %v40 = vld [vmem:[%s1 + $0x24] sm:$0xf]
  %v41 = vld [vmem:[%s1 + $0x28] sm:$0xf]
  %v42 = vld [vmem:[%s1 + $0x2c] sm:$0xf]
  %v43 = vld [vmem:[%s1 + $0x30] sm:$0xf]
  %v44 = vld [vmem:[%s1 + $0x34] sm:$0xf]
  %v45 = vld [vmem:[%s1 + $0x38] sm:$0xf]
  %v46 = vld [vmem:[%s1 + $0x3c] sm:$0xf]
  %v47 = vld [vmem:[%s1 + $0x40] sm:$0xf]
  %v48 = vld [vmem:[%s1 + $0x44] sm:$0xf]
  %v49 = vld [vmem:[%s1 + $0x48] sm:$0xf]
  %v50 = vld [vmem:[%s1 + $0x4c] sm:$0xf]
  %v51 = vld [vmem:[%s1 + $0x50] sm:$0xf]
  %v52 = vld [vmem:[%s1 + $0x54] sm:$0xf]
  %v53 = vld [vmem:[%s1 + $0x58] sm:$0xf]
  %v54 = vld [vmem:[%s1 + $0x5c] sm:$0xf]
  %v55 = vld [vmem:[%s1 + $0x60] sm:$0xf]
  %v56 = vld [vmem:[%s1 + $0x64] sm:$0xf]
  %v57 = vld [vmem:[%s1 + $0x68] sm:$0xf]
  %v58 = vld [vmem:[%s1 + $0x6c] sm:$0xf]
  %v59 = vld [vmem:[%s1 + $0x70] sm:$0xf]
  %v60 = vld [vmem:[%s1 + $0x74] sm:$0xf]
  %v61 = vld [vmem:[%s1 + $0x78] sm:$0xf]
  %v62 = vld [vmem:[%s1 + $0x7c] sm:$0xf]
  %v63 = vld [vmem:[%s2] sm:$0x1]
  %v65 = vlaneseq
  %v66 = vshrl.u32 %v65, 7
  %v67 = vsub.s32 0, %v66
  %v68 = vrot.slane %v63, %v67
  %v86 = vunpack.c.l.b16 %v15
  %v87 = vunpack.c.h.b16 %v15
  %v88 = vunpack.c.l.b16 %v16
  %v89 = vunpack.c.h.b16 %v16
  %v90 = vunpack.c.l.b16 %v17
  %v91 = vunpack.c.h.b16 %v17
  %v92 = vunpack.c.l.b16 %v18
  %v93 = vunpack.c.h.b16 %v18
  %v94 = vunpack.c.l.b16 %v19
  %v95 = vunpack.c.h.b16 %v19
  %v96 = vunpack.c.l.b16 %v20
  %v97 = vunpack.c.h.b16 %v20
  %v98 = vunpack.c.l.b16 %v21
  %v99 = vunpack.c.h.b16 %v21
  %v100 = vunpack.c.l.b16 %v22
  %v101 = vunpack.c.h.b16 %v22
  %v102 = vunpack.c.l.b16 %v23
  %v103 = vunpack.c.h.b16 %v23
  %v104 = vunpack.c.l.b16 %v24
  %v105 = vunpack.c.h.b16 %v24
  %v106 = vunpack.c.l.b16 %v25
  %v107 = vunpack.c.h.b16 %v25
  %v108 = vunpack.c.l.b16 %v26
  %v109 = vunpack.c.h.b16 %v26
  %v110 = vunpack.c.l.b16 %v27
  %v111 = vunpack.c.h.b16 %v27
  %v112 = vunpack.c.l.b16 %v28
  %v113 = vunpack.c.h.b16 %v28
  %v114 = vunpack.c.l.b16 %v29
  %v115 = vunpack.c.h.b16 %v29
  %v116 = vunpack.c.l.b16 %v30
  %v117 = vunpack.c.h.b16 %v30
  %v118 = vpack.c.b16 %v88, %v86
  %v119 = vpack.c.b16 %v89, %v87
  %v120 = vpack.c.b16 %v92, %v90
  %v121 = vpack.c.b16 %v93, %v91
  %v122 = vpack.c.b16 %v96, %v94
  %v123 = vpack.c.b16 %v97, %v95
  %v124 = vpack.c.b16 %v100, %v98
  %v125 = vpack.c.b16 %v101, %v99
  %v126 = vpack.c.b16 %v104, %v102
  %v127 = vpack.c.b16 %v105, %v103
  %v128 = vpack.c.b16 %v108, %v106
  %v129 = vpack.c.b16 %v109, %v107
  %v130 = vpack.c.b16 %v112, %v110
  %v131 = vpack.c.b16 %v113, %v111
  %v132 = vpack.c.b16 %v116, %v114
  %v133 = vpack.c.b16 %v117, %v115
  %v182 = vunpack.c.l.b16 %v31
  %v183 = vunpack.c.l.b16 %v32
  %v184 = vunpack.c.l.b16 %v33
  %v185 = vunpack.c.l.b16 %v34
  %v186 = vunpack.c.l.b16 %v35
  %v187 = vunpack.c.l.b16 %v36
  %v188 = vunpack.c.l.b16 %v37
  %v189 = vunpack.c.l.b16 %v38
  %v190 = vunpack.c.l.b16 %v39
  %v191 = vunpack.c.l.b16 %v40
  %v192 = vunpack.c.l.b16 %v41
  %v193 = vunpack.c.l.b16 %v42
  %v194 = vunpack.c.l.b16 %v43
  %v195 = vunpack.c.l.b16 %v44
  %v196 = vunpack.c.l.b16 %v45
  %v197 = vunpack.c.l.b16 %v46
  %v198 = vunpack.c.l.b16 %v47
  %v199 = vunpack.c.l.b16 %v48
  %v200 = vunpack.c.l.b16 %v49
  %v201 = vunpack.c.l.b16 %v50
  %v202 = vunpack.c.l.b16 %v51
  %v203 = vunpack.c.l.b16 %v52
  %v204 = vunpack.c.l.b16 %v53
  %v205 = vunpack.c.l.b16 %v54
  %v206 = vunpack.c.l.b16 %v55
  %v207 = vunpack.c.l.b16 %v56
  %v208 = vunpack.c.l.b16 %v57
  %v209 = vunpack.c.l.b16 %v58
  %v210 = vunpack.c.l.b16 %v59
  %v211 = vunpack.c.l.b16 %v60
  %v212 = vunpack.c.l.b16 %v61
  %v213 = vunpack.c.l.b16 %v62
  %v214 = vpack.c.b16 %v183, %v182
  %v215 = vpack.c.b16 %v185, %v184
  %v216 = vpack.c.b16 %v187, %v186
  %v217 = vpack.c.b16 %v189, %v188
  %v218 = vpack.c.b16 %v191, %v190
  %v219 = vpack.c.b16 %v193, %v192
  %v220 = vpack.c.b16 %v195, %v194
  %v221 = vpack.c.b16 %v197, %v196
  %v222 = vpack.c.b16 %v199, %v198
  %v223 = vpack.c.b16 %v201, %v200
  %v224 = vpack.c.b16 %v203, %v202
  %v225 = vpack.c.b16 %v205, %v204
  %v226 = vpack.c.b16 %v207, %v206
  %v227 = vpack.c.b16 %v209, %v208
  %v228 = vpack.c.b16 %v211, %v210
  %v229 = vpack.c.b16 %v213, %v212
  %246 = vmatprep.subr.bf16.mxu0 0
  %247 = vmatpush1.bf16.msra.mxu0 %v214
  %248 = vmatprep.subr.bf16.mxu0 0
  %249 = vmatpush1.bf16.msra.mxu0 %v215
  %250 = vmatprep.subr.bf16.mxu0 0
  %251 = vmatpush1.bf16.msra.mxu0 %v216
  %252 = vmatprep.subr.bf16.mxu0 0
  %253 = vmatpush1.bf16.msra.mxu0 %v217
  %254 = vmatprep.subr.bf16.mxu0 0
  %255 = vmatpush1.bf16.msra.mxu0 %v218
  %256 = vmatprep.subr.bf16.mxu0 0
  %257 = vmatpush1.bf16.msra.mxu0 %v219
  %258 = vmatprep.subr.bf16.mxu0 0
  %259 = vmatpush1.bf16.msra.mxu0 %v220
  %260 = vmatprep.subr.bf16.mxu0 0
  %261 = vmatpush1.bf16.msra.mxu0 %v221
  %262 = vmatprep.subr.bf16.mxu0 0
  %263 = vmatpush1.bf16.msra.mxu0 %v222
  %264 = vmatprep.subr.bf16.mxu0 0
  %265 = vmatpush1.bf16.msra.mxu0 %v223
  %266 = vmatprep.subr.bf16.mxu0 0
  %267 = vmatpush1.bf16.msra.mxu0 %v224
  %268 = vmatprep.subr.bf16.mxu0 0
  %269 = vmatpush1.bf16.msra.mxu0 %v225
  %270 = vmatprep.subr.bf16.mxu0 0
  %271 = vmatpush1.bf16.msra.mxu0 %v226
  %272 = vmatprep.subr.bf16.mxu0 0
  %273 = vmatpush1.bf16.msra.mxu0 %v227
  %274 = vmatprep.subr.bf16.mxu0 0
  %275 = vmatpush1.bf16.msra.mxu0 %v228
  %276 = vmatprep.subr.bf16.mxu0 0
  %277 = vmatpush1.bf16.msra.mxu0 %v229
  %278 = vmatprep.mubr.bf16.mxu0 %v119
  %279 = vmatmul.mubr.bf16.gmra.mrb[0].mxu0 %v118
  %v280 = vpop.f32.mrb[0].mxu0
  %v281 = vadd.f32 %v68, %v280
  %v282 = vpop.f32.mrb[0].mxu0
  %v283 = vpop.f32.mrb[0].mxu0
  %v284 = vadd.f32 %v68, %v283
  %v285 = vpop.f32.mrb[0].mxu0
  %286 = vmatprep.mubr.bf16.mxu0 %v121
  %287 = vmatmul.mubr.bf16.gmra.mrb[0].mxu0 %v120
  %v288 = vpop.f32.mrb[0].mxu0
  %v289 = vadd.f32 %v68, %v288
  %v290 = vpop.f32.mrb[0].mxu0
  %v291 = vpop.f32.mrb[0].mxu0
  %v292 = vadd.f32 %v68, %v291
  %v293 = vpop.f32.mrb[0].mxu0
  %294 = vmatprep.mubr.bf16.mxu0 %v123
  %295 = vmatmul.mubr.bf16.gmra.mrb[0].mxu0 %v122
  %v296 = vpop.f32.mrb[0].mxu0
  %v297 = vadd.f32 %v68, %v296
  %v298 = vpop.f32.mrb[0].mxu0
  %v299 = vpop.f32.mrb[0].mxu0
  %v300 = vadd.f32 %v68, %v299
  %v301 = vpop.f32.mrb[0].mxu0
  %302 = vmatprep.mubr.bf16.mxu0 %v125
  %303 = vmatmul.mubr.bf16.gmra.mrb[0].mxu0 %v124
  %v304 = vpop.f32.mrb[0].mxu0
  %v305 = vadd.f32 %v68, %v304
  %v306 = vpop.f32.mrb[0].mxu0
  %v307 = vpop.f32.mrb[0].mxu0
  %v308 = vadd.f32 %v68, %v307
  %v309 = vpop.f32.mrb[0].mxu0
  %310 = vmatprep.mubr.bf16.mxu0 %v127
  %311 = vmatmul.mubr.bf16.gmra.mrb[0].mxu0 %v126
  %v312 = vpop.f32.mrb[0].mxu0
  %v313 = vadd.f32 %v68, %v312
  %v314 = vpop.f32.mrb[0].mxu0
  %v315 = vpop.f32.mrb[0].mxu0
  %v316 = vadd.f32 %v68, %v315
  %v317 = vpop.f32.mrb[0].mxu0
  %318 = vmatprep.mubr.bf16.mxu0 %v129
  %319 = vmatmul.mubr.bf16.gmra.mrb[0].mxu0 %v128
  %v320 = vpop.f32.mrb[0].mxu0
  %v321 = vadd.f32 %v68, %v320
  %v322 = vpop.f32.mrb[0].mxu0
  %v323 = vpop.f32.mrb[0].mxu0
  %v324 = vadd.f32 %v68, %v323
  %v325 = vpop.f32.mrb[0].mxu0
  %326 = vmatprep.mubr.bf16.mxu0 %v131
  %327 = vmatmul.mubr.bf16.gmra.mrb[0].mxu0 %v130
  %v328 = vpop.f32.mrb[0].mxu0
  %v329 = vadd.f32 %v68, %v328
  %v330 = vpop.f32.mrb[0].mxu0
  %v331 = vpop.f32.mrb[0].mxu0
  %v332 = vadd.f32 %v68, %v331
  %v333 = vpop.f32.mrb[0].mxu0
  %334 = vmatprep.mubr.bf16.mxu0 %v133
  %335 = vmatmul.mubr.bf16.gmra.mrb[0].mxu0 %v132
  %v336 = vpop.f32.mrb[0].mxu0
  %v337 = vadd.f32 %v68, %v336
  %v338 = vpop.f32.mrb[0].mxu0
  %v339 = vpop.f32.mrb[0].mxu0
  %v340 = vadd.f32 %v68, %v339
  %v341 = vpop.f32.mrb[0].mxu0
  %342 = vdwg.mxu0
  %v343 = vmax.f32 %v281, 0.0
  %v344 = vmax.f32 %v284, 0.0
  %v345 = vmax.f32 %v289, 0.0
  %v346 = vmax.f32 %v292, 0.0
  %v347 = vmax.f32 %v297, 0.0
  %v348 = vmax.f32 %v300, 0.0
  %v349 = vmax.f32 %v305, 0.0
  %v350 = vmax.f32 %v308, 0.0
  %v351 = vmax.f32 %v313, 0.0
  %v352 = vmax.f32 %v316, 0.0
  %v353 = vmax.f32 %v321, 0.0
  %v354 = vmax.f32 %v324, 0.0
  %v355 = vmax.f32 %v329, 0.0
  %v356 = vmax.f32 %v332, 0.0
  %v357 = vmax.f32 %v337, 0.0
  %v358 = vmax.f32 %v340, 0.0
  %v359 = vpack.c.bf16 %v344, %v343
  %v360 = vpack.c.bf16 %v346, %v345
  %v361 = vpack.c.bf16 %v348, %v347
  %v362 = vpack.c.bf16 %v350, %v349
  %v363 = vpack.c.bf16 %v352, %v351
  %v364 = vpack.c.bf16 %v354, %v353
  %v365 = vpack.c.bf16 %v356, %v355
  %v366 = vpack.c.bf16 %v358, %v357
  %v375 = vunpack.c.l.b16 %v359
  %v376 = vunpack.c.h.b16 %v359
  %v377 = vunpack.c.l.b16 %v360
  %v378 = vunpack.c.h.b16 %v360
  %v379 = vunpack.c.l.b16 %v361
  %v380 = vunpack.c.h.b16 %v361
  %v381 = vunpack.c.l.b16 %v362
  %v382 = vunpack.c.h.b16 %v362
  %v383 = vunpack.c.l.b16 %v363
  %v384 = vunpack.c.h.b16 %v363
  %v385 = vunpack.c.l.b16 %v364
  %v386 = vunpack.c.h.b16 %v364
  %v387 = vunpack.c.l.b16 %v365
  %v388 = vunpack.c.h.b16 %v365
  %v389 = vunpack.c.l.b16 %v366
  %v390 = vunpack.c.h.b16 %v366
  %v391 = vpack.c.b16 %v375, %v375
  %v392 = vpack.c.b16 %v376, %v376
  %v393 = vpack.c.b16 %v377, %v377
  %v394 = vpack.c.b16 %v378, %v378
  %v395 = vpack.c.b16 %v379, %v379
  %v396 = vpack.c.b16 %v380, %v380
  %v397 = vpack.c.b16 %v381, %v381
  %v398 = vpack.c.b16 %v382, %v382
  %v399 = vpack.c.b16 %v383, %v383
  %v400 = vpack.c.b16 %v384, %v384
  %v401 = vpack.c.b16 %v385, %v385
  %v402 = vpack.c.b16 %v386, %v386
  %v403 = vpack.c.b16 %v387, %v387
  %v404 = vpack.c.b16 %v388, %v388
  %v405 = vpack.c.b16 %v389, %v389
  %v406 = vpack.c.b16 %v390, %v390
  %423 = vst [vmem:[%s3] sm:$0xf] %v391
  %424 = vst [vmem:[%s3 + $0x4] sm:$0xf] %v392
  %425 = vst [vmem:[%s3 + $0x8] sm:$0xf] %v393
  %426 = vst [vmem:[%s3 + $0xc] sm:$0xf] %v394
  %427 = vst [vmem:[%s3 + $0x10] sm:$0xf] %v395
  %428 = vst [vmem:[%s3 + $0x14] sm:$0xf] %v396
  %429 = vst [vmem:[%s3 + $0x18] sm:$0xf] %v397
  %430 = vst [vmem:[%s3 + $0x1c] sm:$0xf] %v398
  %431 = vst [vmem:[%s3 + $0x20] sm:$0xf] %v399
  %432 = vst [vmem:[%s3 + $0x24] sm:$0xf] %v400
  %433 = vst [vmem:[%s3 + $0x28] sm:$0xf] %v401
  %434 = vst [vmem:[%s3 + $0x2c] sm:$0xf] %v402
  %435 = vst [vmem:[%s3 + $0x30] sm:$0xf] %v403
  %436 = vst [vmem:[%s3 + $0x34] sm:$0xf] %v404
  %437 = vst [vmem:[%s3 + $0x38] sm:$0xf] %v405
  %438 = vst [vmem:[%s3 + $0x3c] sm:$0xf] %v406
  // Predicated region
  $region14: #{conv_dqn_forward.4} parent=0 // pred_check
    _
  $region15: #{conv_dqn_forward.4} parent=0 // pred_check_branch
    %440 = sbr.rel (0) target = $region17
  $region16: #{conv_dqn_forward.4} parent=0 // pred_region
    _
  $region17: #{conv_dqn_forward.4} parent=0 // pred_fallthru
    _
  // Predicated region
  $region18: #{conv_dqn_forward.4} parent=0 // pred_check
    _
  $region19: #{conv_dqn_forward.4} parent=0 // pred_check_branch
    %442 = sbr.rel (0) target = $region21
  $region20: #{conv_dqn_forward.4} parent=0 // pred_region
    _
  $region21: #{conv_dqn_forward.4} parent=0 // pred_fallthru
    _

// kernel: conv_dqn_forward.6
$region0: #{conv_dqn_forward.6}
  #allocation0 [shape = 'u32[]', space=smem, size = 0x4, offset = 0x4, fixed_abs, tag = 'smem constant byte address 0x4 - core index']
  #allocation1 [shape = 'u32[144,128]{1,0:T(1,128)}', space=vmem, size = 0x12000, scoped, tag = 'internal scratch']
  %s0 = inlined_call_operand.vmem [shape: bf16[8,1152], index: 0, kind: input, shape index: {}]
  %s1 = inlined_call_operand.vmem [shape: bf16[1152,128], index: 1, kind: input, shape index: {}]
  %s2 = inlined_call_operand.vmem [shape: f32[1,128], index: 2, kind: input, shape index: {}]
  %s3 = inlined_call_operand.vmem [shape: bf16[8,128], index: 3, kind: output, shape index: {}]
  %s4 = sld [smem:[#allocation0]]
  $region22: #{conv_dqn_forward.6} parent=0
    _
  %s6 = ssub.s32 1, %s4
  %s7 = scalar_select 0, %s6, %s4
  // Predicated region
  $region2: #{conv_dqn_forward.6} parent=0 // pred_check
    _
  $region3: #{conv_dqn_forward.6} parent=0 // pred_check_branch
    %9 = sbr.rel (0) target = $region5
  $region4: #{conv_dqn_forward.6} parent=0 // pred_region
    _
  $region5: #{conv_dqn_forward.6} parent=0 // pred_fallthru
    _
  // Predicated region
  $region6: #{conv_dqn_forward.6} parent=0 // pred_check
    _
  $region7: #{conv_dqn_forward.6} parent=0 // pred_check_branch
    %11 = sbr.rel (0) target = $region9
  $region8: #{conv_dqn_forward.6} parent=0 // pred_region
    _
  $region9: #{conv_dqn_forward.6} parent=0 // pred_fallthru
    _
  // Predicated region
  $region10: #{conv_dqn_forward.6} parent=0 // pred_check
    _
  $region11: #{conv_dqn_forward.6} parent=0 // pred_check_branch
    %13 = sbr.rel (0) target = $region13
  $region12: #{conv_dqn_forward.6} parent=0 // pred_region
    _
  $region13: #{conv_dqn_forward.6} parent=0 // pred_fallthru
    _
  %v15 = vld [vmem:[%s0] sm:$0xff]
  %v16 = vld [vmem:[%s0 + $0x8] sm:$0xff]
  %v17 = vld [vmem:[%s0 + $0x10] sm:$0xff]
  %v18 = vld [vmem:[%s0 + $0x18] sm:$0xff]
  %v19 = vld [vmem:[%s0 + $0x20] sm:$0xf]
  %v20 = vld [vmem:[%s1] sm:$0xf]
  %v21 = vld [vmem:[%s1 + $0x4] sm:$0xf]
  %v22 = vld [vmem:[%s1 + $0x8] sm:$0xf]
  %v23 = vld [vmem:[%s1 + $0xc] sm:$0xf]
  %v24 = vld [vmem:[%s1 + $0x10] sm:$0xf]
  %v25 = vld [vmem:[%s1 + $0x14] sm:$0xf]
  %v26 = vld [vmem:[%s1 + $0x18] sm:$0xf]
  %v27 = vld [vmem:[%s1 + $0x1c] sm:$0xf]
  %v28 = vld [vmem:[%s1 + $0x20] sm:$0xf]
  %v29 = vld [vmem:[%s1 + $0x24] sm:$0xf]
  %v30 = vld [vmem:[%s1 + $0x28] sm:$0xf]
  %v31 = vld [vmem:[%s1 + $0x2c] sm:$0xf]
  %v32 = vld [vmem:[%s1 + $0x30] sm:$0xf]
  %v33 = vld [vmem:[%s1 + $0x34] sm:$0xf]
  %v34 = vld [vmem:[%s1 + $0x38] sm:$0xf]
  %v35 = vld [vmem:[%s1 + $0x3c] sm:$0xf]
  %v36 = vld [vmem:[%s1 + $0x40] sm:$0xf]
  %v37 = vld [vmem:[%s1 + $0x44] sm:$0xf]
  %v38 = vld [vmem:[%s1 + $0x48] sm:$0xf]
  %v39 = vld [vmem:[%s1 + $0x4c] sm:$0xf]
  %v40 = vld [vmem:[%s1 + $0x50] sm:$0xf]
  %v41 = vld [vmem:[%s1 + $0x54] sm:$0xf]
  %v42 = vld [vmem:[%s1 + $0x58] sm:$0xf]
  %v43 = vld [vmem:[%s1 + $0x5c] sm:$0xf]
  %v44 = vld [vmem:[%s1 + $0x60] sm:$0xf]
  %v45 = vld [vmem:[%s1 + $0x64] sm:$0xf]
  %v46 = vld [vmem:[%s1 + $0x68] sm:$0xf]
  %v47 = vld [vmem:[%s1 + $0x6c] sm:$0xf]
  %v48 = vld [vmem:[%s1 + $0x70] sm:$0xf]
  %v49 = vld [vmem:[%s1 + $0x74] sm:$0xf]
  %v50 = vld [vmem:[%s1 + $0x78] sm:$0xf]
  %v51 = vld [vmem:[%s1 + $0x7c] sm:$0xf]
  %v52 = vld [vmem:[%s1 + $0x80] sm:$0xf]
  %v53 = vld [vmem:[%s1 + $0x84] sm:$0xf]
  %v54 = vld [vmem:[%s1 + $0x88] sm:$0xf]
  %v55 = vld [vmem:[%s1 + $0x8c] sm:$0xf]
  %v56 = vld [vmem:[%s1 + $0x90] sm:$0xf]
  %v57 = vld [vmem:[%s1 + $0x94] sm:$0xf]
  %v58 = vld [vmem:[%s1 + $0x98] sm:$0xf]
  %v59 = vld [vmem:[%s1 + $0x9c] sm:$0xf]
  %v60 = vld [vmem:[%s1 + $0xa0] sm:$0xf]
  %v61 = vld [vmem:[%s1 + $0xa4] sm:$0xf]
  %v62 = vld [vmem:[%s1 + $0xa8] sm:$0xf]
  %v63 = vld [vmem:[%s1 + $0xac] sm:$0xf]
  %v64 = vld [vmem:[%s1 + $0xb0] sm:$0xf]
  %v65 = vld [vmem:[%s1 + $0xb4] sm:$0xf]
  %v66 = vld [vmem:[%s1 + $0xb8] sm:$0xf]
  %v67 = vld [vmem:[%s1 + $0xbc] sm:$0xf]
  %v68 = vld [vmem:[%s1 + $0xc0] sm:$0xf]
  %v69 = vld [vmem:[%s1 + $0xc4] sm:$0xf]
  %v70 = vld [vmem:[%s1 + $0xc8] sm:$0xf]
  %v71 = vld [vmem:[%s1 + $0xcc] sm:$0xf]
  %v72 = vld [vmem:[%s1 + $0xd0] sm:$0xf]
  %v73 = vld [vmem:[%s1 + $0xd4] sm:$0xf]
  %v74 = vld [vmem:[%s1 + $0xd8] sm:$0xf]
  %v75 = vld [vmem:[%s1 + $0xdc] sm:$0xf]
  %v76 = vld [vmem:[%s1 + $0xe0] sm:$0xf]
  %v77 = vld [vmem:[%s1 + $0xe4] sm:$0xf]
  %v78 = vld [vmem:[%s1 + $0xe8] sm:$0xf]
  %v79 = vld [vmem:[%s1 + $0xec] sm:$0xf]
  %v80 = vld [vmem:[%s1 + $0xf0] sm:$0xf]
  %v81 = vld [vmem:[%s1 + $0xf4] sm:$0xf]
  %v82 = vld [vmem:[%s1 + $0xf8] sm:$0xf]
  %v83 = vld [vmem:[%s1 + $0xfc] sm:$0xf]
  %v84 = vld [vmem:[%s1 + $0x100] sm:$0xf]
  %v85 = vld [vmem:[%s1 + $0x104] sm:$0xf]
  %v86 = vld [vmem:[%s1 + $0x108] sm:$0xf]
  %v87 = vld [vmem:[%s1 + $0x10c] sm:$0xf]
  %v88 = vld [vmem:[%s1 + $0x110] sm:$0xf]
  %v89 = vld [vmem:[%s1 + $0x114] sm:$0xf]
  %v90 = vld [vmem:[%s1 + $0x118] sm:$0xf]
  %v91 = vld [vmem:[%s1 + $0x11c] sm:$0xf]
  %v92 = vld [vmem:[%s1 + $0x120] sm:$0xf]
  %v93 = vld [vmem:[%s1 + $0x124] sm:$0xf]
  %v94 = vld [vmem:[%s1 + $0x128] sm:$0xf]
  %v95 = vld [vmem:[%s1 + $0x12c] sm:$0xf]
  %v96 = vld [vmem:[%s1 + $0x130] sm:$0xf]
  %v97 = vld [vmem:[%s1 + $0x134] sm:$0xf]
  %v98 = vld [vmem:[%s1 + $0x138] sm:$0xf]
  %v99 = vld [vmem:[%s1 + $0x13c] sm:$0xf]
  %v100 = vld [vmem:[%s1 + $0x140] sm:$0xf]
  %v101 = vld [vmem:[%s1 + $0x144] sm:$0xf]
  %v102 = vld [vmem:[%s1 + $0x148] sm:$0xf]
  %v103 = vld [vmem:[%s1 + $0x14c] sm:$0xf]
  %v104 = vld [vmem:[%s1 + $0x150] sm:$0xf]
  %v105 = vld [vmem:[%s1 + $0x154] sm:$0xf]
  %v106 = vld [vmem:[%s1 + $0x158] sm:$0xf]
  %v107 = vld [vmem:[%s1 + $0x15c] sm:$0xf]
  %v108 = vld [vmem:[%s1 + $0x160] sm:$0xf]
  %v109 = vld [vmem:[%s1 + $0x164] sm:$0xf]
  %v110 = vld [vmem:[%s1 + $0x168] sm:$0xf]
  %v111 = vld [vmem:[%s1 + $0x16c] sm:$0xf]
  %v112 = vld [vmem:[%s1 + $0x170] sm:$0xf]
  %v113 = vld [vmem:[%s1 + $0x174] sm:$0xf]
  %v114 = vld [vmem:[%s1 + $0x178] sm:$0xf]
  %v115 = vld [vmem:[%s1 + $0x17c] sm:$0xf]
  %v116 = vld [vmem:[%s1 + $0x180] sm:$0xf]
  %v117 = vld [vmem:[%s1 + $0x184] sm:$0xf]
  %v118 = vld [vmem:[%s1 + $0x188] sm:$0xf]
  %v119 = vld [vmem:[%s1 + $0x18c] sm:$0xf]
  %v120 = vld [vmem:[%s1 + $0x190] sm:$0xf]
  %v121 = vld [vmem:[%s1 + $0x194] sm:$0xf]
  %v122 = vld [vmem:[%s1 + $0x198] sm:$0xf]
  %v123 = vld [vmem:[%s1 + $0x19c] sm:$0xf]
  %v124 = vld [vmem:[%s1 + $0x1a0] sm:$0xf]
  %v125 = vld [vmem:[%s1 + $0x1a4] sm:$0xf]
  %v126 = vld [vmem:[%s1 + $0x1a8] sm:$0xf]
  %v127 = vld [vmem:[%s1 + $0x1ac] sm:$0xf]
  %v128 = vld [vmem:[%s1 + $0x1b0] sm:$0xf]
  %v129 = vld [vmem:[%s1 + $0x1b4] sm:$0xf]
  %v130 = vld [vmem:[%s1 + $0x1b8] sm:$0xf]
  %v131 = vld [vmem:[%s1 + $0x1bc] sm:$0xf]
  %v132 = vld [vmem:[%s1 + $0x1c0] sm:$0xf]
  %v133 = vld [vmem:[%s1 + $0x1c4] sm:$0xf]
  %v134 = vld [vmem:[%s1 + $0x1c8] sm:$0xf]
  %v135 = vld [vmem:[%s1 + $0x1cc] sm:$0xf]
  %v136 = vld [vmem:[%s1 + $0x1d0] sm:$0xf]
  %v137 = vld [vmem:[%s1 + $0x1d4] sm:$0xf]
  %v138 = vld [vmem:[%s1 + $0x1d8] sm:$0xf]
  %v139 = vld [vmem:[%s1 + $0x1dc] sm:$0xf]
  %v140 = vld [vmem:[%s1 + $0x1e0] sm:$0xf]
  %v141 = vld [vmem:[%s1 + $0x1e4] sm:$0xf]
  %v142 = vld [vmem:[%s1 + $0x1e8] sm:$0xf]
  %v143 = vld [vmem:[%s1 + $0x1ec] sm:$0xf]
  %v144 = vld [vmem:[%s1 + $0x1f0] sm:$0xf]
  %v145 = vld [vmem:[%s1 + $0x1f4] sm:$0xf]
  %v146 = vld [vmem:[%s1 + $0x1f8] sm:$0xf]
  %v147 = vld [vmem:[%s1 + $0x1fc] sm:$0xf]
  %v148 = vld [vmem:[%s1 + $0x200] sm:$0xf]
  %v149 = vld [vmem:[%s1 + $0x204] sm:$0xf]
  %v150 = vld [vmem:[%s1 + $0x208] sm:$0xf]
  %v151 = vld [vmem:[%s1 + $0x20c] sm:$0xf]
  %v152 = vld [vmem:[%s1 + $0x210] sm:$0xf]
  %v153 = vld [vmem:[%s1 + $0x214] sm:$0xf]
  %v154 = vld [vmem:[%s1 + $0x218] sm:$0xf]
  %v155 = vld [vmem:[%s1 + $0x21c] sm:$0xf]
  %v156 = vld [vmem:[%s1 + $0x220] sm:$0xf]
  %v157 = vld [vmem:[%s1 + $0x224] sm:$0xf]
  %v158 = vld [vmem:[%s1 + $0x228] sm:$0xf]
  %v159 = vld [vmem:[%s1 + $0x22c] sm:$0xf]
  %v160 = vld [vmem:[%s1 + $0x230] sm:$0xf]
  %v161 = vld [vmem:[%s1 + $0x234] sm:$0xf]
  %v162 = vld [vmem:[%s1 + $0x238] sm:$0xf]
  %v163 = vld [vmem:[%s1 + $0x23c] sm:$0xf]
  %v164 = vld [vmem:[%s2] sm:$0x1]
  %v166 = vlaneseq
  %v167 = vshrl.u32 %v166, 7
  %v168 = vsub.s32 0, %v167
  %v169 = vrot.slane %v164, %v168
  %v176 = vunpack.c.l.b16 %v15
  %v177 = vunpack.c.h.b16 %v15
  %v178 = vunpack.c.l.b16 %v16
  %v179 = vunpack.c.h.b16 %v16
  %v180 = vunpack.c.l.b16 %v17
  %v181 = vunpack.c.h.b16 %v17
  %v182 = vunpack.c.l.b16 %v18
  %v183 = vunpack.c.h.b16 %v18
  %v184 = vunpack.c.l.b16 %v19
  %v185 = vpack.c.b16 %v176, %v176
  %v186 = vpack.c.b16 %v177, %v177
  %v187 = vpack.c.b16 %v178, %v178
  %v188 = vpack.c.b16 %v179, %v179
  %v189 = vpack.c.b16 %v180, %v180
  %v190 = vpack.c.b16 %v181, %v181
  %v191 = vpack.c.b16 %v182, %v182
  %v192 = vpack.c.b16 %v183, %v183
  %v193 = vpack.c.b16 %v184, %v184
  %v347 = vunpack.c.l.b16 %v20
  %v348 = vunpack.c.l.b16 %v21
  %v349 = vunpack.c.l.b16 %v22
  %v350 = vunpack.c.l.b16 %v23
  %v351 = vunpack.c.l.b16 %v24
  %v352 = vunpack.c.l.b16 %v25
  %v353 = vunpack.c.l.b16 %v26
  %v354 = vunpack.c.l.b16 %v27
  %v355 = vunpack.c.l.b16 %v28
  %v356 = vunpack.c.l.b16 %v29
  %v357 = vunpack.c.l.b16 %v30
  %v358 = vunpack.c.l.b16 %v31
  %v359 = vunpack.c.l.b16 %v32
  %v360 = vunpack.c.l.b16 %v33
  %v361 = vunpack.c.l.b16 %v34
  %v362 = vunpack.c.l.b16 %v35
  %v363 = vunpack.c.l.b16 %v36
  %v364 = vunpack.c.l.b16 %v37
  %v365 = vunpack.c.l.b16 %v38
  %v366 = vunpack.c.l.b16 %v39
  %v367 = vunpack.c.l.b16 %v40
  %v368 = vunpack.c.l.b16 %v41
  %v369 = vunpack.c.l.b16 %v42
  %v370 = vunpack.c.l.b16 %v43
  %v371 = vunpack.c.l.b16 %v44
  %v372 = vunpack.c.l.b16 %v45
  %v373 = vunpack.c.l.b16 %v46
  %v374 = vunpack.c.l.b16 %v47
  %v375 = vunpack.c.l.b16 %v48
  %v376 = vunpack.c.l.b16 %v49
  %v377 = vunpack.c.l.b16 %v50
  %v378 = vunpack.c.l.b16 %v51
  %v379 = vunpack.c.l.b16 %v52
  %v380 = vunpack.c.l.b16 %v53
  %v381 = vunpack.c.l.b16 %v54
  %v382 = vunpack.c.l.b16 %v55
  %v383 = vunpack.c.l.b16 %v56
  %v384 = vunpack.c.l.b16 %v57
  %v385 = vunpack.c.l.b16 %v58
  %v386 = vunpack.c.l.b16 %v59
  %v387 = vunpack.c.l.b16 %v60
  %v388 = vunpack.c.l.b16 %v61
  %v389 = vunpack.c.l.b16 %v62
  %v390 = vunpack.c.l.b16 %v63
  %v391 = vunpack.c.l.b16 %v64
  %v392 = vunpack.c.l.b16 %v65
  %v393 = vunpack.c.l.b16 %v66
  %v394 = vunpack.c.l.b16 %v67
  %v395 = vunpack.c.l.b16 %v68
  %v396 = vunpack.c.l.b16 %v69
  %v397 = vunpack.c.l.b16 %v70
  %v398 = vunpack.c.l.b16 %v71
  %v399 = vunpack.c.l.b16 %v72
  %v400 = vunpack.c.l.b16 %v73
  %v401 = vunpack.c.l.b16 %v74
  %v402 = vunpack.c.l.b16 %v75
  %v403 = vunpack.c.l.b16 %v76
  %v404 = vunpack.c.l.b16 %v77
  %v405 = vunpack.c.l.b16 %v78
  %v406 = vunpack.c.l.b16 %v79
  %v407 = vunpack.c.l.b16 %v80
  %v408 = vunpack.c.l.b16 %v81
  %v409 = vunpack.c.l.b16 %v82
  %v410 = vunpack.c.l.b16 %v83
  %v411 = vunpack.c.l.b16 %v84
  %v412 = vunpack.c.l.b16 %v85
  %v413 = vunpack.c.l.b16 %v86
  %v414 = vunpack.c.l.b16 %v87
  %v415 = vunpack.c.l.b16 %v88
  %v416 = vunpack.c.l.b16 %v89
  %v417 = vunpack.c.l.b16 %v90
  %v418 = vunpack.c.l.b16 %v91
  %v419 = vunpack.c.l.b16 %v92
  %v420 = vunpack.c.l.b16 %v93
  %v421 = vunpack.c.l.b16 %v94
  %v422 = vunpack.c.l.b16 %v95
  %v423 = vunpack.c.l.b16 %v96
  %v424 = vunpack.c.l.b16 %v97
  %v425 = vunpack.c.l.b16 %v98
  %v426 = vunpack.c.l.b16 %v99
  %v427 = vunpack.c.l.b16 %v100
  %v428 = vunpack.c.l.b16 %v101
  %v429 = vunpack.c.l.b16 %v102
  %v430 = vunpack.c.l.b16 %v103
  %v431 = vunpack.c.l.b16 %v104
  %v432 = vunpack.c.l.b16 %v105
  %v433 = vunpack.c.l.b16 %v106
  %v434 = vunpack.c.l.b16 %v107
  %v435 = vunpack.c.l.b16 %v108
  %v436 = vunpack.c.l.b16 %v109
  %v437 = vunpack.c.l.b16 %v110
  %v438 = vunpack.c.l.b16 %v111
  %v439 = vunpack.c.l.b16 %v112
  %v440 = vunpack.c.l.b16 %v113
  %v441 = vunpack.c.l.b16 %v114
  %v442 = vunpack.c.l.b16 %v115
  %v443 = vunpack.c.l.b16 %v116
  %v444 = vunpack.c.l.b16 %v117
  %v445 = vunpack.c.l.b16 %v118
  %v446 = vunpack.c.l.b16 %v119
  %v447 = vunpack.c.l.b16 %v120
  %v448 = vunpack.c.l.b16 %v121
  %v449 = vunpack.c.l.b16 %v122
  %v450 = vunpack.c.l.b16 %v123
  %v451 = vunpack.c.l.b16 %v124
  %v452 = vunpack.c.l.b16 %v125
  %v453 = vunpack.c.l.b16 %v126
  %v454 = vunpack.c.l.b16 %v127
  %v455 = vunpack.c.l.b16 %v128
  %v456 = vunpack.c.l.b16 %v129
  %v457 = vunpack.c.l.b16 %v130
  %v458 = vunpack.c.l.b16 %v131
  %v459 = vunpack.c.l.b16 %v132
  %v460 = vunpack.c.l.b16 %v133
  %v461 = vunpack.c.l.b16 %v134
  %v462 = vunpack.c.l.b16 %v135
  %v463 = vunpack.c.l.b16 %v136
  %v464 = vunpack.c.l.b16 %v137
  %v465 = vunpack.c.l.b16 %v138
  %v466 = vunpack.c.l.b16 %v139
  %v467 = vunpack.c.l.b16 %v140
  %v468 = vunpack.c.l.b16 %v141
  %v469 = vunpack.c.l.b16 %v142
  %v470 = vunpack.c.l.b16 %v143
  %v471 = vunpack.c.l.b16 %v144
  %v472 = vunpack.c.l.b16 %v145
  %v473 = vunpack.c.l.b16 %v146
  %v474 = vunpack.c.l.b16 %v147
  %v475 = vunpack.c.l.b16 %v148
  %v476 = vunpack.c.l.b16 %v149
  %v477 = vunpack.c.l.b16 %v150
  %v478 = vunpack.c.l.b16 %v151
  %v479 = vunpack.c.l.b16 %v152
  %v480 = vunpack.c.l.b16 %v153
  %v481 = vunpack.c.l.b16 %v154
  %v482 = vunpack.c.l.b16 %v155
  %v483 = vunpack.c.l.b16 %v156
  %v484 = vunpack.c.l.b16 %v157
  %v485 = vunpack.c.l.b16 %v158
  %v486 = vunpack.c.l.b16 %v159
  %v487 = vunpack.c.l.b16 %v160
  %v488 = vunpack.c.l.b16 %v161
  %v489 = vunpack.c.l.b16 %v162
  %v490 = vunpack.c.l.b16 %v163
  %v491 = vpack.c.b16 %v348, %v347
  %v492 = vpack.c.b16 %v350, %v349
  %v493 = vpack.c.b16 %v352, %v351
  %v494 = vpack.c.b16 %v354, %v353
  %v495 = vpack.c.b16 %v356, %v355
  %v496 = vpack.c.b16 %v358, %v357
  %v497 = vpack.c.b16 %v360, %v359
  %v498 = vpack.c.b16 %v362, %v361
  %v499 = vpack.c.b16 %v364, %v363
  %v500 = vpack.c.b16 %v366, %v365
  %v501 = vpack.c.b16 %v368, %v367
  %v502 = vpack.c.b16 %v370, %v369
  %v503 = vpack.c.b16 %v372, %v371
  %v504 = vpack.c.b16 %v374, %v373
  %v505 = vpack.c.b16 %v376, %v375
  %v506 = vpack.c.b16 %v378, %v377
  %v507 = vpack.c.b16 %v380, %v379
  %v508 = vpack.c.b16 %v382, %v381
  %v509 = vpack.c.b16 %v384, %v383
  %v510 = vpack.c.b16 %v386, %v385
  %v511 = vpack.c.b16 %v388, %v387
  %v512 = vpack.c.b16 %v390, %v389
  %v513 = vpack.c.b16 %v392, %v391
  %v514 = vpack.c.b16 %v394, %v393
  %v515 = vpack.c.b16 %v396, %v395
  %v516 = vpack.c.b16 %v398, %v397
  %v517 = vpack.c.b16 %v400, %v399
  %v518 = vpack.c.b16 %v402, %v401
  %v519 = vpack.c.b16 %v404, %v403
  %v520 = vpack.c.b16 %v406, %v405
  %v521 = vpack.c.b16 %v408, %v407
  %v522 = vpack.c.b16 %v410, %v409
  %v523 = vpack.c.b16 %v412, %v411
  %v524 = vpack.c.b16 %v414, %v413
  %v525 = vpack.c.b16 %v416, %v415
  %v526 = vpack.c.b16 %v418, %v417
  %v527 = vpack.c.b16 %v420, %v419
  %v528 = vpack.c.b16 %v422, %v421
  %v529 = vpack.c.b16 %v424, %v423
  %v530 = vpack.c.b16 %v426, %v425
  %v531 = vpack.c.b16 %v428, %v427
  %v532 = vpack.c.b16 %v430, %v429
  %v533 = vpack.c.b16 %v432, %v431
  %v534 = vpack.c.b16 %v434, %v433
  %v535 = vpack.c.b16 %v436, %v435
  %v536 = vpack.c.b16 %v438, %v437
  %v537 = vpack.c.b16 %v440, %v439
  %v538 = vpack.c.b16 %v442, %v441
  %v539 = vpack.c.b16 %v444, %v443
  %v540 = vpack.c.b16 %v446, %v445
  %v541 = vpack.c.b16 %v448, %v447
  %v542 = vpack.c.b16 %v450, %v449
  %v543 = vpack.c.b16 %v452, %v451
  %v544 = vpack.c.b16 %v454, %v453
  %v545 = vpack.c.b16 %v456, %v455
  %v546 = vpack.c.b16 %v458, %v457
  %v547 = vpack.c.b16 %v460, %v459
  %v548 = vpack.c.b16 %v462, %v461
  %v549 = vpack.c.b16 %v464, %v463
  %v550 = vpack.c.b16 %v466, %v465
  %v551 = vpack.c.b16 %v468, %v467
  %v552 = vpack.c.b16 %v470, %v469
  %v553 = vpack.c.b16 %v472, %v471
  %v554 = vpack.c.b16 %v474, %v473
  %v555 = vpack.c.b16 %v476, %v475
  %v556 = vpack.c.b16 %v478, %v477
  %v557 = vpack.c.b16 %v480, %v479
  %v558 = vpack.c.b16 %v482, %v481
  %v559 = vpack.c.b16 %v484, %v483
  %v560 = vpack.c.b16 %v486, %v485
  %v561 = vpack.c.b16 %v488, %v487
  %v562 = vpack.c.b16 %v490, %v489
  %635 = vmatprep.subr.bf16.mxu0 0
  %636 = vmatpush1.bf16.msra.mxu0 %v491
  %637 = vmatprep.subr.bf16.mxu0 0
  %638 = vmatpush1.bf16.msra.mxu0 %v492
  %639 = vmatprep.subr.bf16.mxu0 0
  %640 = vmatpush1.bf16.msra.mxu0 %v493
  %641 = vmatprep.subr.bf16.mxu0 0
  %642 = vmatpush1.bf16.msra.mxu0 %v494
  %643 = vmatprep.subr.bf16.mxu0 0
  %644 = vmatpush1.bf16.msra.mxu0 %v495
  %645 = vmatprep.subr.bf16.mxu0 0
  %646 = vmatpush1.bf16.msra.mxu0 %v496
  %647 = vmatprep.subr.bf16.mxu0 0
  %648 = vmatpush1.bf16.msra.mxu0 %v497
  %649 = vmatprep.subr.bf16.mxu0 0
  %650 = vmatpush1.bf16.msra.mxu0 %v498
  %651 = vmatprep.subr.bf16.mxu0 0
  %652 = vmatpush1.bf16.msra.mxu0 %v499
  %653 = vmatprep.subr.bf16.mxu0 0
  %654 = vmatpush1.bf16.msra.mxu0 %v500
  %655 = vmatprep.subr.bf16.mxu0 0
  %656 = vmatpush1.bf16.msra.mxu0 %v501
  %657 = vmatprep.subr.bf16.mxu0 0
  %658 = vmatpush1.bf16.msra.mxu0 %v502
  %659 = vmatprep.subr.bf16.mxu0 0
  %660 = vmatpush1.bf16.msra.mxu0 %v503
  %661 = vmatprep.subr.bf16.mxu0 0
  %662 = vmatpush1.bf16.msra.mxu0 %v504
  %663 = vmatprep.subr.bf16.mxu0 0
  %664 = vmatpush1.bf16.msra.mxu0 %v505
  %665 = vmatprep.subr.bf16.mxu0 0
  %666 = vmatpush1.bf16.msra.mxu0 %v506
  %667 = vmatprep.mubr.bf16.mxu0 %v186
  %668 = vmatmul.mubr.bf16.gmra.mrb[0].mxu0 %v185
  %v669 = vpop.f32.mrb[0].mxu0
  %v670 = vadd.f32 %v169, %v669
  %v671 = vpop.f32.mrb[0].mxu0
  %v672 = vpop.f32.mrb[0].mxu0
  %v673 = vpop.f32.mrb[0].mxu0
  %674 = vdwg.mxu0
  %675 = vmatprep.subr.bf16.mxu0 0
  %676 = vmatpush1.bf16.msra.mxu0 %v507
  %677 = vmatprep.subr.bf16.mxu0 0
  %678 = vmatpush1.bf16.msra.mxu0 %v508
  %679 = vmatprep.subr.bf16.mxu0 0
  %680 = vmatpush1.bf16.msra.mxu0 %v509
  %681 = vmatprep.subr.bf16.mxu0 0
  %682 = vmatpush1.bf16.msra.mxu0 %v510
  %683 = vmatprep.subr.bf16.mxu0 0
  %684 = vmatpush1.bf16.msra.mxu0 %v511
  %685 = vmatprep.subr.bf16.mxu0 0
  %686 = vmatpush1.bf16.msra.mxu0 %v512
  %687 = vmatprep.subr.bf16.mxu0 0
  %688 = vmatpush1.bf16.msra.mxu0 %v513
  %689 = vmatprep.subr.bf16.mxu0 0
  %690 = vmatpush1.bf16.msra.mxu0 %v514
  %691 = vmatprep.subr.bf16.mxu0 0
  %692 = vmatpush1.bf16.msra.mxu0 %v515
  %693 = vmatprep.subr.bf16.mxu0 0
  %694 = vmatpush1.bf16.msra.mxu0 %v516
  %695 = vmatprep.subr.bf16.mxu0 0
  %696 = vmatpush1.bf16.msra.mxu0 %v517
  %697 = vmatprep.subr.bf16.mxu0 0
  %698 = vmatpush1.bf16.msra.mxu0 %v518
  %699 = vmatprep.subr.bf16.mxu0 0
  %700 = vmatpush1.bf16.msra.mxu0 %v519
  %701 = vmatprep.subr.bf16.mxu0 0
  %702 = vmatpush1.bf16.msra.mxu0 %v520
  %703 = vmatprep.subr.bf16.mxu0 0
  %704 = vmatpush1.bf16.msra.mxu0 %v521
  %705 = vmatprep.subr.bf16.mxu0 0
  %706 = vmatpush1.bf16.msra.mxu0 %v522
  %707 = vmatprep.mubr.bf16.mxu0 %v188
  %708 = vmatmul.mubr.bf16.gmra.mrb[0].mxu0 %v187
  %v709 = vpop.f32.mrb[0].mxu0
  %v710 = vadd.f32 %v670, %v709
  %v711 = vpop.f32.mrb[0].mxu0
  %v712 = vpop.f32.mrb[0].mxu0
  %v713 = vpop.f32.mrb[0].mxu0
  %714 = vdwg.mxu0
  %715 = vmatprep.subr.bf16.mxu0 0
  %716 = vmatpush1.bf16.msra.mxu0 %v523
  %717 = vmatprep.subr.bf16.mxu0 0
  %718 = vmatpush1.bf16.msra.mxu0 %v524
  %719 = vmatprep.subr.bf16.mxu0 0
  %720 = vmatpush1.bf16.msra.mxu0 %v525
  %721 = vmatprep.subr.bf16.mxu0 0
  %722 = vmatpush1.bf16.msra.mxu0 %v526
  %723 = vmatprep.subr.bf16.mxu0 0
  %724 = vmatpush1.bf16.msra.mxu0 %v527
  %725 = vmatprep.subr.bf16.mxu0 0
  %726 = vmatpush1.bf16.msra.mxu0 %v528
  %727 = vmatprep.subr.bf16.mxu0 0
  %728 = vmatpush1.bf16.msra.mxu0 %v529
  %729 = vmatprep.subr.bf16.mxu0 0
  %730 = vmatpush1.bf16.msra.mxu0 %v530
  %731 = vmatprep.subr.bf16.mxu0 0
  %732 = vmatpush1.bf16.msra.mxu0 %v531
  %733 = vmatprep.subr.bf16.mxu0 0
  %734 = vmatpush1.bf16.msra.mxu0 %v532
  %735 = vmatprep.subr.bf16.mxu0 0
  %736 = vmatpush1.bf16.msra.mxu0 %v533
  %737 = vmatprep.subr.bf16.mxu0 0
  %738 = vmatpush1.bf16.msra.mxu0 %v534
  %739 = vmatprep.subr.bf16.mxu0 0
  %740 = vmatpush1.bf16.msra.mxu0 %v535
  %741 = vmatprep.subr.bf16.mxu0 0
  %742 = vmatpush1.bf16.msra.mxu0 %v536
  %743 = vmatprep.subr.bf16.mxu0 0
  %744 = vmatpush1.bf16.msra.mxu0 %v537
  %745 = vmatprep.subr.bf16.mxu0 0
  %746 = vmatpush1.bf16.msra.mxu0 %v538
  %747 = vmatprep.mubr.bf16.mxu0 %v190
  %748 = vmatmul.mubr.bf16.gmra.mrb[0].mxu0 %v189
  %v749 = vpop.f32.mrb[0].mxu0
  %v750 = vadd.f32 %v710, %v749
  %v751 = vpop.f32.mrb[0].mxu0
  %v752 = vpop.f32.mrb[0].mxu0
  %v753 = vpop.f32.mrb[0].mxu0
  %754 = vdwg.mxu0
  %755 = vmatprep.subr.bf16.mxu0 0
  %756 = vmatpush1.bf16.msra.mxu0 %v539
  %757 = vmatprep.subr.bf16.mxu0 0
  %758 = vmatpush1.bf16.msra.mxu0 %v540
  %759 = vmatprep.subr.bf16.mxu0 0
  %760 = vmatpush1.bf16.msra.mxu0 %v541
  %761 = vmatprep.subr.bf16.mxu0 0
  %762 = vmatpush1.bf16.msra.mxu0 %v542
  %763 = vmatprep.subr.bf16.mxu0 0
  %764 = vmatpush1.bf16.msra.mxu0 %v543
  %765 = vmatprep.subr.bf16.mxu0 0
  %766 = vmatpush1.bf16.msra.mxu0 %v544
  %767 = vmatprep.subr.bf16.mxu0 0
  %768 = vmatpush1.bf16.msra.mxu0 %v545
  %769 = vmatprep.subr.bf16.mxu0 0
  %770 = vmatpush1.bf16.msra.mxu0 %v546
  %771 = vmatprep.subr.bf16.mxu0 0
  %772 = vmatpush1.bf16.msra.mxu0 %v547
  %773 = vmatprep.subr.bf16.mxu0 0
  %774 = vmatpush1.bf16.msra.mxu0 %v548
  %775 = vmatprep.subr.bf16.mxu0 0
  %776 = vmatpush1.bf16.msra.mxu0 %v549
  %777 = vmatprep.subr.bf16.mxu0 0
  %778 = vmatpush1.bf16.msra.mxu0 %v550
  %779 = vmatprep.subr.bf16.mxu0 0
  %780 = vmatpush1.bf16.msra.mxu0 %v551
  %781 = vmatprep.subr.bf16.mxu0 0
  %782 = vmatpush1.bf16.msra.mxu0 %v552
  %783 = vmatprep.subr.bf16.mxu0 0
  %784 = vmatpush1.bf16.msra.mxu0 %v553
  %785 = vmatprep.subr.bf16.mxu0 0
  %786 = vmatpush1.bf16.msra.mxu0 %v554
  %787 = vmatprep.mubr.bf16.mxu0 %v192
  %788 = vmatmul.mubr.bf16.gmra.mrb[0].mxu0 %v191
  %v789 = vpop.f32.mrb[0].mxu0
  %v790 = vadd.f32 %v750, %v789
  %v791 = vpop.f32.mrb[0].mxu0
  %v792 = vpop.f32.mrb[0].mxu0
  %v793 = vpop.f32.mrb[0].mxu0
  %794 = vdwg.mxu0
  %795 = vmatprep.subr.bf16.mxu0 0
  %796 = vmatpush1.bf16.msra.mxu0 %v555
  %797 = vmatprep.subr.bf16.mxu0 0
  %798 = vmatpush1.bf16.msra.mxu0 %v556
  %799 = vmatprep.subr.bf16.mxu0 0
  %800 = vmatpush1.bf16.msra.mxu0 %v557
  %801 = vmatprep.subr.bf16.mxu0 0
  %802 = vmatpush1.bf16.msra.mxu0 %v558
  %803 = vmatprep.subr.bf16.mxu0 0
  %804 = vmatpush1.bf16.msra.mxu0 %v559
  %805 = vmatprep.subr.bf16.mxu0 0
  %806 = vmatpush1.bf16.msra.mxu0 %v560
  %807 = vmatprep.subr.bf16.mxu0 0
  %808 = vmatpush1.bf16.msra.mxu0 %v561
  %809 = vmatprep.subr.bf16.mxu0 0
  %810 = vmatpush1.bf16.msra.mxu0 %v562
  %811 = vmatprep.subr.bf16.mxu0 0
  %812 = vmatpush1.bf16.msra.mxu0 0
  %813 = vmatprep.subr.bf16.mxu0 0
  %814 = vmatpush1.bf16.msra.mxu0 0
  %815 = vmatprep.subr.bf16.mxu0 0
  %816 = vmatpush1.bf16.msra.mxu0 0
  %817 = vmatprep.subr.bf16.mxu0 0
  %818 = vmatpush1.bf16.msra.mxu0 0
  %819 = vmatprep.subr.bf16.mxu0 0
  %820 = vmatpush1.bf16.msra.mxu0 0
  %821 = vmatprep.subr.bf16.mxu0 0
  %822 = vmatpush1.bf16.msra.mxu0 0
  %823 = vmatprep.subr.bf16.mxu0 0
  %824 = vmatpush1.bf16.msra.mxu0 0
  %825 = vmatprep.subr.bf16.mxu0 0
  %826 = vmatpush1.bf16.msra.mxu0 0
  %827 = vmatprep.mubr.bf16.mxu0 0
  %828 = vmatmul.mubr.bf16.gmra.mrb[0].mxu0 %v193
  %v829 = vpop.f32.mrb[0].mxu0
  %v830 = vadd.f32 %v790, %v829
  %v831 = vpop.f32.mrb[0].mxu0
  %v832 = vpop.f32.mrb[0].mxu0
  %v833 = vpop.f32.mrb[0].mxu0
  %834 = vdwg.mxu0
  %v835 = vmax.f32 %v830, 0.0
  %v836 = vpack.c.bf16 %v835, %v835
  %837 = vst [vmem:[%s3] sm:$0xf] %v836
  // Predicated region
  $region14: #{conv_dqn_forward.6} parent=0 // pred_check
    _
  $region15: #{conv_dqn_forward.6} parent=0 // pred_check_branch
    %839 = sbr.rel (0) target = $region17
  $region16: #{conv_dqn_forward.6} parent=0 // pred_region
    _
  $region17: #{conv_dqn_forward.6} parent=0 // pred_fallthru
    _
  // Predicated region
  $region18: #{conv_dqn_forward.6} parent=0 // pred_check
    _
  $region19: #{conv_dqn_forward.6} parent=0 // pred_check_branch
    %841 = sbr.rel (0) target = $region21
  $region20: #{conv_dqn_forward.6} parent=0 // pred_region
    _
  $region21: #{conv_dqn_forward.6} parent=0 // pred_fallthru
    _

// kernel: conv_dqn_forward.7
$region0: #{conv_dqn_forward.7}
  #allocation0 [shape = 'u32[]', space=smem, size = 0x4, offset = 0x4, fixed_abs, tag = 'smem constant byte address 0x4 - core index']
  #allocation1 [shape = 'u32[144,128]{1,0:T(1,128)}', space=vmem, size = 0x12000, scoped, tag = 'internal scratch']
  %s0 = inlined_call_operand.vmem [shape: bf16[8,128], index: 0, kind: input, shape index: {}]
  %s1 = inlined_call_operand.vmem [shape: bf16[128,128], index: 1, kind: input, shape index: {}]
  %s2 = inlined_call_operand.vmem [shape: f32[1,128], index: 2, kind: input, shape index: {}]
  %s3 = inlined_call_operand.vmem [shape: bf16[128,256], index: 3, kind: input, shape index: {}]
  %s4 = inlined_call_operand.vmem [shape: f32[1,256], index: 4, kind: input, shape index: {}]
  %s5 = inlined_call_operand.vmem [shape: bf16[256,128], index: 5, kind: input, shape index: {}]
  %s6 = inlined_call_operand.vmem [shape: f32[1,128], index: 6, kind: input, shape index: {}]
  %s7 = inlined_call_operand.vmem [shape: f32[8,128], index: 7, kind: output, shape index: {}]
  %s8 = sld [smem:[#allocation0]]
  $region38: #{conv_dqn_forward.7} parent=0
    _
  %s10 = ssub.s32 1, %s8
  %s11 = scalar_select 0, %s10, %s8
  // Predicated region
  $region2: #{conv_dqn_forward.7} parent=0 // pred_check
    _
  $region3: #{conv_dqn_forward.7} parent=0 // pred_check_branch
    %13 = sbr.rel (0) target = $region5
  $region4: #{conv_dqn_forward.7} parent=0 // pred_region
    _
  $region5: #{conv_dqn_forward.7} parent=0 // pred_fallthru
    _
  // Predicated region
  $region6: #{conv_dqn_forward.7} parent=0 // pred_check
    _
  $region7: #{conv_dqn_forward.7} parent=0 // pred_check_branch
    %15 = sbr.rel (0) target = $region9
  $region8: #{conv_dqn_forward.7} parent=0 // pred_region
    _
  $region9: #{conv_dqn_forward.7} parent=0 // pred_fallthru
    _
  // Predicated region
  $region10: #{conv_dqn_forward.7} parent=0 // pred_check
    _
  $region11: #{conv_dqn_forward.7} parent=0 // pred_check_branch
    %17 = sbr.rel (0) target = $region13
  $region12: #{conv_dqn_forward.7} parent=0 // pred_region
    _
  $region13: #{conv_dqn_forward.7} parent=0 // pred_fallthru
    _
  // Predicated region
  $region14: #{conv_dqn_forward.7} parent=0 // pred_check
    _
  $region15: #{conv_dqn_forward.7} parent=0 // pred_check_branch
    %19 = sbr.rel (0) target = $region17
  $region16: #{conv_dqn_forward.7} parent=0 // pred_region
    _
  $region17: #{conv_dqn_forward.7} parent=0 // pred_fallthru
    _
  // Predicated region
  $region18: #{conv_dqn_forward.7} parent=0 // pred_check
    _
  $region19: #{conv_dqn_forward.7} parent=0 // pred_check_branch
    %21 = sbr.rel (0) target = $region21
  $region20: #{conv_dqn_forward.7} parent=0 // pred_region
    _
  $region21: #{conv_dqn_forward.7} parent=0 // pred_fallthru
    _
  // Predicated region
  $region22: #{conv_dqn_forward.7} parent=0 // pred_check
    _
  $region23: #{conv_dqn_forward.7} parent=0 // pred_check_branch
    %23 = sbr.rel (0) target = $region25
  $region24: #{conv_dqn_forward.7} parent=0 // pred_region
    _
  $region25: #{conv_dqn_forward.7} parent=0 // pred_fallthru
    _
  // Predicated region
  $region26: #{conv_dqn_forward.7} parent=0 // pred_check
    _
  $region27: #{conv_dqn_forward.7} parent=0 // pred_check_branch
    %25 = sbr.rel (0) target = $region29
  $region28: #{conv_dqn_forward.7} parent=0 // pred_region
    _
  $region29: #{conv_dqn_forward.7} parent=0 // pred_fallthru
    _
  %v27 = vld [vmem:[%s0] sm:$0xf]
  %v28 = vld [vmem:[%s1] sm:$0xf]
  %v29 = vld [vmem:[%s1 + $0x4] sm:$0xf]
  %v30 = vld [vmem:[%s1 + $0x8] sm:$0xf]
  %v31 = vld [vmem:[%s1 + $0xc] sm:$0xf]
  %v32 = vld [vmem:[%s1 + $0x10] sm:$0xf]
  %v33 = vld [vmem:[%s1 + $0x14] sm:$0xf]
  %v34 = vld [vmem:[%s1 + $0x18] sm:$0xf]
  %v35 = vld [vmem:[%s1 + $0x1c] sm:$0xf]
  %v36 = vld [vmem:[%s1 + $0x20] sm:$0xf]
  %v37 = vld [vmem:[%s1 + $0x24] sm:$0xf]
  %v38 = vld [vmem:[%s1 + $0x28] sm:$0xf]
  %v39 = vld [vmem:[%s1 + $0x2c] sm:$0xf]
  %v40 = vld [vmem:[%s1 + $0x30] sm:$0xf]
  %v41 = vld [vmem:[%s1 + $0x34] sm:$0xf]
  %v42 = vld [vmem:[%s1 + $0x38] sm:$0xf]
  %v43 = vld [vmem:[%s1 + $0x3c] sm:$0xf]
  %v44 = vld [vmem:[%s2] sm:$0x1]
  %v46 = vlaneseq
  %v47 = vshrl.u32 %v46, 7
  %v48 = vsub.s32 0, %v47
  %v49 = vrot.slane %v44, %v48
  %v67 = vunpack.c.l.b16 %v28
  %v68 = vunpack.c.l.b16 %v29
  %v69 = vunpack.c.l.b16 %v30
  %v70 = vunpack.c.l.b16 %v31
  %v71 = vunpack.c.l.b16 %v32
  %v72 = vunpack.c.l.b16 %v33
  %v73 = vunpack.c.l.b16 %v34
  %v74 = vunpack.c.l.b16 %v35
  %v75 = vunpack.c.l.b16 %v36
  %v76 = vunpack.c.l.b16 %v37
  %v77 = vunpack.c.l.b16 %v38
  %v78 = vunpack.c.l.b16 %v39
  %v79 = vunpack.c.l.b16 %v40
  %v80 = vunpack.c.l.b16 %v41
  %v81 = vunpack.c.l.b16 %v42
  %v82 = vunpack.c.l.b16 %v43
  %v83 = vpack.c.b16 %v68, %v67
  %v84 = vpack.c.b16 %v70, %v69
  %v85 = vpack.c.b16 %v72, %v71
  %v86 = vpack.c.b16 %v74, %v73
  %v87 = vpack.c.b16 %v76, %v75
  %v88 = vpack.c.b16 %v78, %v77
  %v89 = vpack.c.b16 %v80, %v79
  %v90 = vpack.c.b16 %v82, %v81
  %99 = vmatprep.subr.bf16.mxu0 0
  %100 = vmatpush1.bf16.msra.mxu0 %v83
  %101 = vmatprep.subr.bf16.mxu0 0
  %102 = vmatpush1.bf16.msra.mxu0 %v84
  %103 = vmatprep.subr.bf16.mxu0 0
  %104 = vmatpush1.bf16.msra.mxu0 %v85
  %105 = vmatprep.subr.bf16.mxu0 0
  %106 = vmatpush1.bf16.msra.mxu0 %v86
  %107 = vmatprep.subr.bf16.mxu0 0
  %108 = vmatpush1.bf16.msra.mxu0 %v87
  %109 = vmatprep.subr.bf16.mxu0 0
  %110 = vmatpush1.bf16.msra.mxu0 %v88
  %111 = vmatprep.subr.bf16.mxu0 0
  %112 = vmatpush1.bf16.msra.mxu0 %v89
  %113 = vmatprep.subr.bf16.mxu0 0
  %114 = vmatpush1.bf16.msra.mxu0 %v90
  %115 = vmatprep.subr.bf16.mxu0 0
  %116 = vmatpush1.bf16.msra.mxu0 0
  %117 = vmatprep.subr.bf16.mxu0 0
  %118 = vmatpush1.bf16.msra.mxu0 0
  %119 = vmatprep.subr.bf16.mxu0 0
  %120 = vmatpush1.bf16.msra.mxu0 0
  %121 = vmatprep.subr.bf16.mxu0 0
  %122 = vmatpush1.bf16.msra.mxu0 0
  %123 = vmatprep.subr.bf16.mxu0 0
  %124 = vmatpush1.bf16.msra.mxu0 0
  %125 = vmatprep.subr.bf16.mxu0 0
  %126 = vmatpush1.bf16.msra.mxu0 0
  %127 = vmatprep.subr.bf16.mxu0 0
  %128 = vmatpush1.bf16.msra.mxu0 0
  %129 = vmatprep.subr.bf16.mxu0 0
  %130 = vmatpush1.bf16.msra.mxu0 0
  %131 = vmatprep.mubr.bf16.mxu0 0
  %132 = vmatmul.mubr.bf16.gmra.mrb[0].mxu0 %v27
  %v133 = vpop.f32.mrb[0].mxu0
  %v134 = vadd.f32 %v49, %v133
  %v135 = vpop.f32.mrb[0].mxu0
  %v136 = vpop.f32.mrb[0].mxu0
  %v137 = vpop.f32.mrb[0].mxu0
  %138 = vdwg.mxu0
  %v139 = vmax.f32 %v134, 0.0
  %v140 = vpack.c.bf16 %v139, %v139
  %v141 = vld [vmem:[%s3] sm:$0xff]
  %v142 = vld [vmem:[%s3 + $0x8] sm:$0xff]
  %v143 = vld [vmem:[%s3 + $0x10] sm:$0xff]
  %v144 = vld [vmem:[%s3 + $0x18] sm:$0xff]
  %v145 = vld [vmem:[%s3 + $0x20] sm:$0xff]
  %v146 = vld [vmem:[%s3 + $0x28] sm:$0xff]
  %v147 = vld [vmem:[%s3 + $0x30] sm:$0xff]
  %v148 = vld [vmem:[%s3 + $0x38] sm:$0xff]
  %v149 = vld [vmem:[%s3 + $0x40] sm:$0xff]
  %v150 = vld [vmem:[%s3 + $0x48] sm:$0xff]
  %v151 = vld [vmem:[%s3 + $0x50] sm:$0xff]
  %v152 = vld [vmem:[%s3 + $0x58] sm:$0xff]
  %v153 = vld [vmem:[%s3 + $0x60] sm:$0xff]
  %v154 = vld [vmem:[%s3 + $0x68] sm:$0xff]
  %v155 = vld [vmem:[%s3 + $0x70] sm:$0xff]
  %v156 = vld [vmem:[%s3 + $0x78] sm:$0xff]
  %v157 = vld [vmem:[%s4] sm:$0x3]
  %v159 = vlaneseq
  %v160 = vshrl.u32 %v159, 7
  %v161 = vsub.s32 0, %v160
  %v162 = vrot.slane %v157, %v161
  %v163 = vlaneseq
  %v164 = vshrl.u32 %v163, 7
  %v165 = vsub.s32 1, %v164
  %v166 = vrot.slane %v157, %v165
  %v185 = vunpack.c.l.b16 %v141
  %v186 = vunpack.c.h.b16 %v141
  %v187 = vunpack.c.l.b16 %v142
  %v188 = vunpack.c.h.b16 %v142
  %v189 = vunpack.c.l.b16 %v143
  %v190 = vunpack.c.h.b16 %v143
  %v191 = vunpack.c.l.b16 %v144
  %v192 = vunpack.c.h.b16 %v144
  %v193 = vunpack.c.l.b16 %v145
  %v194 = vunpack.c.h.b16 %v145
  %v195 = vunpack.c.l.b16 %v146
  %v196 = vunpack.c.h.b16 %v146
  %v197 = vunpack.c.l.b16 %v147
  %v198 = vunpack.c.h.b16 %v147
  %v199 = vunpack.c.l.b16 %v148
  %v200 = vunpack.c.h.b16 %v148
  %v201 = vunpack.c.l.b16 %v149
  %v202 = vunpack.c.h.b16 %v149
  %v203 = vunpack.c.l.b16 %v150
  %v204 = vunpack.c.h.b16 %v150
  %v205 = vunpack.c.l.b16 %v151
  %v206 = vunpack.c.h.b16 %v151
  %v207 = vunpack.c.l.b16 %v152
  %v208 = vunpack.c.h.b16 %v152
  %v209 = vunpack.c.l.b16 %v153
  %v210 = vunpack.c.h.b16 %v153
  %v211 = vunpack.c.l.b16 %v154
  %v212 = vunpack.c.h.b16 %v154
  %v213 = vunpack.c.l.b16 %v155
  %v214 = vunpack.c.h.b16 %v155
  %v215 = vunpack.c.l.b16 %v156
  %v216 = vunpack.c.h.b16 %v156
  %v217 = vpack.c.b16 %v187, %v185
  %v218 = vpack.c.b16 %v188, %v186
  %v219 = vpack.c.b16 %v191, %v189
  %v220 = vpack.c.b16 %v192, %v190
  %v221 = vpack.c.b16 %v195, %v193
  %v222 = vpack.c.b16 %v196, %v194
  %v223 = vpack.c.b16 %v199, %v197
  %v224 = vpack.c.b16 %v200, %v198
  %v225 = vpack.c.b16 %v203, %v201
  %v226 = vpack.c.b16 %v204, %v202
  %v227 = vpack.c.b16 %v207, %v205
  %v228 = vpack.c.b16 %v208, %v206
  %v229 = vpack.c.b16 %v211, %v209
  %v230 = vpack.c.b16 %v212, %v210
  %v231 = vpack.c.b16 %v215, %v213
  %v232 = vpack.c.b16 %v216, %v214
  %249 = vmatprep.subr.bf16.mxu0 %v218
  %250 = vmatpush1.bf16.msra.mxu0 %v217
  %251 = vmatprep.subr.bf16.mxu0 %v220
  %252 = vmatpush1.bf16.msra.mxu0 %v219
  %253 = vmatprep.subr.bf16.mxu0 %v222
  %254 = vmatpush1.bf16.msra.mxu0 %v221
  %255 = vmatprep.subr.bf16.mxu0 %v224
  %256 = vmatpush1.bf16.msra.mxu0 %v223
  %257 = vmatprep.subr.bf16.mxu0 %v226
  %258 = vmatpush1.bf16.msra.mxu0 %v225
  %259 = vmatprep.subr.bf16.mxu0 %v228
  %260 = vmatpush1.bf16.msra.mxu0 %v227
  %261 = vmatprep.subr.bf16.mxu0 %v230
  %262 = vmatpush1.bf16.msra.mxu0 %v229
  %263 = vmatprep.subr.bf16.mxu0 %v232
  %264 = vmatpush1.bf16.msra.mxu0 %v231
  %265 = vmatprep.subr.bf16.mxu0 0
  %266 = vmatpush1.bf16.msra.mxu0 0
  %267 = vmatprep.subr.bf16.mxu0 0
  %268 = vmatpush1.bf16.msra.mxu0 0
  %269 = vmatprep.subr.bf16.mxu0 0
  %270 = vmatpush1.bf16.msra.mxu0 0
  %271 = vmatprep.subr.bf16.mxu0 0
  %272 = vmatpush1.bf16.msra.mxu0 0
  %273 = vmatprep.subr.bf16.mxu0 0
  %274 = vmatpush1.bf16.msra.mxu0 0
  %275 = vmatprep.subr.bf16.mxu0 0
  %276 = vmatpush1.bf16.msra.mxu0 0
  %277 = vmatprep.subr.bf16.mxu0 0
  %278 = vmatpush1.bf16.msra.mxu0 0
  %279 = vmatprep.subr.bf16.mxu0 0
  %280 = vmatpush1.bf16.msra.mxu0 0
  %281 = vmatprep.mubr.bf16.mxu0 0
  %282 = vmatmul.mubr.bf16.gmra.mrb[0].mxu0 %v140
  %v283 = vpop.f32.mrb[0].mxu0
  %v284 = vadd.f32 %v162, %v283
  %v285 = vpop.f32.mrb[0].mxu0
  %v286 = vadd.f32 %v166, %v285
  %v287 = vpop.f32.mrb[0].mxu0
  %v288 = vpop.f32.mrb[0].mxu0
  %289 = vdwg.mxu0
  %v290 = vmax.f32 %v284, 0.0
  %v291 = vmax.f32 %v286, 0.0
  %v292 = vpack.c.bf16 %v290, %v290
  %v293 = vpack.c.bf16 %v291, %v291
  %v294 = vld [vmem:[%s5] sm:$0xf]
  %v295 = vld [vmem:[%s5 + $0x4] sm:$0xf]
  %v296 = vld [vmem:[%s5 + $0x8] sm:$0xf]
  %v297 = vld [vmem:[%s5 + $0xc] sm:$0xf]
  %v298 = vld [vmem:[%s5 + $0x10] sm:$0xf]
  %v299 = vld [vmem:[%s5 + $0x14] sm:$0xf]
  %v300 = vld [vmem:[%s5 + $0x18] sm:$0xf]
  %v301 = vld [vmem:[%s5 + $0x1c] sm:$0xf]
  %v302 = vld [vmem:[%s5 + $0x20] sm:$0xf]
  %v303 = vld [vmem:[%s5 + $0x24] sm:$0xf]
  %v304 = vld [vmem:[%s5 + $0x28] sm:$0xf]
  %v305 = vld [vmem:[%s5 + $0x2c] sm:$0xf]
  %v306 = vld [vmem:[%s5 + $0x30] sm:$0xf]
  %v307 = vld [vmem:[%s5 + $0x34] sm:$0xf]
  %v308 = vld [vmem:[%s5 + $0x38] sm:$0xf]
  %v309 = vld [vmem:[%s5 + $0x3c] sm:$0xf]
  %v310 = vld [vmem:[%s5 + $0x40] sm:$0xf]
  %v311 = vld [vmem:[%s5 + $0x44] sm:$0xf]
  %v312 = vld [vmem:[%s5 + $0x48] sm:$0xf]
  %v313 = vld [vmem:[%s5 + $0x4c] sm:$0xf]
  %v314 = vld [vmem:[%s5 + $0x50] sm:$0xf]
  %v315 = vld [vmem:[%s5 + $0x54] sm:$0xf]
  %v316 = vld [vmem:[%s5 + $0x58] sm:$0xf]
  %v317 = vld [vmem:[%s5 + $0x5c] sm:$0xf]
  %v318 = vld [vmem:[%s5 + $0x60] sm:$0xf]
  %v319 = vld [vmem:[%s5 + $0x64] sm:$0xf]
  %v320 = vld [vmem:[%s5 + $0x68] sm:$0xf]
  %v321 = vld [vmem:[%s5 + $0x6c] sm:$0xf]
  %v322 = vld [vmem:[%s5 + $0x70] sm:$0xf]
  %v323 = vld [vmem:[%s5 + $0x74] sm:$0xf]
  %v324 = vld [vmem:[%s5 + $0x78] sm:$0xf]
  %v325 = vld [vmem:[%s5 + $0x7c] sm:$0xf]
  %v326 = vld [vmem:[%s6] sm:$0x1]
  %v328 = vlaneseq
  %v329 = vshrl.u32 %v328, 7
  %v330 = vsub.s32 0, %v329
  %v331 = vrot.slane %v326, %v330
  %v365 = vunpack.c.l.b16 %v294
  %v366 = vunpack.c.l.b16 %v295
  %v367 = vunpack.c.l.b16 %v296
  %v368 = vunpack.c.l.b16 %v297
  %v369 = vunpack.c.l.b16 %v298
  %v370 = vunpack.c.l.b16 %v299
  %v371 = vunpack.c.l.b16 %v300
  %v372 = vunpack.c.l.b16 %v301
  %v373 = vunpack.c.l.b16 %v302
  %v374 = vunpack.c.l.b16 %v303
  %v375 = vunpack.c.l.b16 %v304
  %v376 = vunpack.c.l.b16 %v305
  %v377 = vunpack.c.l.b16 %v306
  %v378 = vunpack.c.l.b16 %v307
  %v379 = vunpack.c.l.b16 %v308
  %v380 = vunpack.c.l.b16 %v309
  %v381 = vunpack.c.l.b16 %v310
  %v382 = vunpack.c.l.b16 %v311
  %v383 = vunpack.c.l.b16 %v312
  %v384 = vunpack.c.l.b16 %v313
  %v385 = vunpack.c.l.b16 %v314
  %v386 = vunpack.c.l.b16 %v315
  %v387 = vunpack.c.l.b16 %v316
  %v388 = vunpack.c.l.b16 %v317
  %v389 = vunpack.c.l.b16 %v318
  %v390 = vunpack.c.l.b16 %v319
  %v391 = vunpack.c.l.b16 %v320
  %v392 = vunpack.c.l.b16 %v321
  %v393 = vunpack.c.l.b16 %v322
  %v394 = vunpack.c.l.b16 %v323
  %v395 = vunpack.c.l.b16 %v324
  %v396 = vunpack.c.l.b16 %v325
  %v397 = vpack.c.b16 %v366, %v365
  %v398 = vpack.c.b16 %v368, %v367
  %v399 = vpack.c.b16 %v370, %v369
  %v400 = vpack.c.b16 %v372, %v371
  %v401 = vpack.c.b16 %v374, %v373
  %v402 = vpack.c.b16 %v376, %v375
  %v403 = vpack.c.b16 %v378, %v377
  %v404 = vpack.c.b16 %v380, %v379
  %v405 = vpack.c.b16 %v382, %v381
  %v406 = vpack.c.b16 %v384, %v383
  %v407 = vpack.c.b16 %v386, %v385
  %v408 = vpack.c.b16 %v388, %v387
  %v409 = vpack.c.b16 %v390, %v389
  %v410 = vpack.c.b16 %v392, %v391
  %v411 = vpack.c.b16 %v394, %v393
  %v412 = vpack.c.b16 %v396, %v395
  %429 = vmatprep.subr.bf16.mxu0 0
  %430 = vmatpush1.bf16.msra.mxu0 %v397
  %431 = vmatprep.subr.bf16.mxu0 0
  %432 = vmatpush1.bf16.msra.mxu0 %v398
  %433 = vmatprep.subr.bf16.mxu0 0
  %434 = vmatpush1.bf16.msra.mxu0 %v399
  %435 = vmatprep.subr.bf16.mxu0 0
  %436 = vmatpush1.bf16.msra.mxu0 %v400
  %437 = vmatprep.subr.bf16.mxu0 0
  %438 = vmatpush1.bf16.msra.mxu0 %v401
  %439 = vmatprep.subr.bf16.mxu0 0
  %440 = vmatpush1.bf16.msra.mxu0 %v402
  %441 = vmatprep.subr.bf16.mxu0 0
  %442 = vmatpush1.bf16.msra.mxu0 %v403
  %443 = vmatprep.subr.bf16.mxu0 0
  %444 = vmatpush1.bf16.msra.mxu0 %v404
  %445 = vmatprep.subr.bf16.mxu0 0
  %446 = vmatpush1.bf16.msra.mxu0 %v405
  %447 = vmatprep.subr.bf16.mxu0 0
  %448 = vmatpush1.bf16.msra.mxu0 %v406
  %449 = vmatprep.subr.bf16.mxu0 0
  %450 = vmatpush1.bf16.msra.mxu0 %v407
  %451 = vmatprep.subr.bf16.mxu0 0
  %452 = vmatpush1.bf16.msra.mxu0 %v408
  %453 = vmatprep.subr.bf16.mxu0 0
  %454 = vmatpush1.bf16.msra.mxu0 %v409
  %455 = vmatprep.subr.bf16.mxu0 0
  %456 = vmatpush1.bf16.msra.mxu0 %v410
  %457 = vmatprep.subr.bf16.mxu0 0
  %458 = vmatpush1.bf16.msra.mxu0 %v411
  %459 = vmatprep.subr.bf16.mxu0 0
  %460 = vmatpush1.bf16.msra.mxu0 %v412
  %461 = vmatprep.mubr.bf16.mxu0 %v293
  %462 = vmatmul.mubr.bf16.gmra.mrb[0].mxu0 %v292
  %v463 = vpop.f32.mrb[0].mxu0
  %v464 = vadd.f32 %v331, %v463
  %v465 = vpop.f32.mrb[0].mxu0
  %v466 = vpop.f32.mrb[0].mxu0
  %v467 = vpop.f32.mrb[0].mxu0
  %468 = vdwg.mxu0
  %469 = vst [vmem:[%s7] sm:$0xff] %v464
  // Predicated region
  $region30: #{conv_dqn_forward.7} parent=0 // pred_check
    _
  $region31: #{conv_dqn_forward.7} parent=0 // pred_check_branch
    %471 = sbr.rel (0) target = $region33
  $region32: #{conv_dqn_forward.7} parent=0 // pred_region
    _
  $region33: #{conv_dqn_forward.7} parent=0 // pred_fallthru
    _
  // Predicated region
  $region34: #{conv_dqn_forward.7} parent=0 // pred_check
    _
  $region35: #{conv_dqn_forward.7} parent=0 // pred_check_branch
    %473 = sbr.rel (0) target = $region37
  $region36: #{conv_dqn_forward.7} parent=0 // pred_region
    _
  $region37: #{conv_dqn_forward.7} parent=0 // pred_fallthru
    _

// kernel: conv_dqn_forward.5
$region0: #{conv_dqn_forward.5}
  #allocation0 [shape = 'u32[]', space=smem, size = 0x4, offset = 0x4, fixed_abs, tag = 'smem constant byte address 0x4 - core index']
  #allocation1 [shape = 'u32[144,128]{1,0:T(1,128)}', space=vmem, size = 0x12000, scoped, tag = 'internal scratch']
  %s0 = inlined_call_operand.vmem [shape: bf16[24,2048], index: 0, kind: input, shape index: {}]
  %s1 = inlined_call_operand.vmem [shape: bf16[2048,128], index: 1, kind: input, shape index: {}]
  %s2 = inlined_call_operand.vmem [shape: f32[1,128], index: 2, kind: input, shape index: {}]
  %s3 = inlined_call_operand.vmem [shape: bf16[24,128], index: 3, kind: output, shape index: {}]
  %s4 = sld [smem:[#allocation0]]
  $region22: #{conv_dqn_forward.5} parent=0
    _
  %s6 = ssub.s32 1, %s4
  %s7 = scalar_select 0, %s6, %s4
  // Predicated region
  $region2: #{conv_dqn_forward.5} parent=0 // pred_check
    _
  $region3: #{conv_dqn_forward.5} parent=0 // pred_check_branch
    %9 = sbr.rel (0) target = $region5
  $region4: #{conv_dqn_forward.5} parent=0 // pred_region
    _
  $region5: #{conv_dqn_forward.5} parent=0 // pred_fallthru
    _
  // Predicated region
  $region6: #{conv_dqn_forward.5} parent=0 // pred_check
    _
  $region7: #{conv_dqn_forward.5} parent=0 // pred_check_branch
    %11 = sbr.rel (0) target = $region9
  $region8: #{conv_dqn_forward.5} parent=0 // pred_region
    _
  $region9: #{conv_dqn_forward.5} parent=0 // pred_fallthru
    _
  // Predicated region
  $region10: #{conv_dqn_forward.5} parent=0 // pred_check
    _
  $region11: #{conv_dqn_forward.5} parent=0 // pred_check_branch
    %13 = sbr.rel (0) target = $region13
  $region12: #{conv_dqn_forward.5} parent=0 // pred_region
    _
  $region13: #{conv_dqn_forward.5} parent=0 // pred_fallthru
    _
  %v15 = vld [vmem:[%s0] sm:$0xff]
  %v16 = vld [vmem:[%s0 + $0x8] sm:$0xff]
  %v17 = vld [vmem:[%s0 + $0x10] sm:$0xff]
  %v18 = vld [vmem:[%s0 + $0x18] sm:$0xff]
  %v19 = vld [vmem:[%s0 + $0x20] sm:$0xff]
  %v20 = vld [vmem:[%s0 + $0x28] sm:$0xff]
  %v21 = vld [vmem:[%s0 + $0x30] sm:$0xff]
  %v22 = vld [vmem:[%s0 + $0x38] sm:$0xff]
  %v23 = vld [vmem:[%s0 + $0x40] sm:$0xff]
  %v24 = vld [vmem:[%s0 + $0x48] sm:$0xff]
  %v25 = vld [vmem:[%s0 + $0x50] sm:$0xff]
  %v26 = vld [vmem:[%s0 + $0x58] sm:$0xff]
  %v27 = vld [vmem:[%s0 + $0x60] sm:$0xff]
  %v28 = vld [vmem:[%s0 + $0x68] sm:$0xff]
  %v29 = vld [vmem:[%s0 + $0x70] sm:$0xff]
  %v30 = vld [vmem:[%s0 + $0x78] sm:$0xff]
  %v31 = vld [vmem:[%s0 + $0x80] sm:$0xff]
  %v32 = vld [vmem:[%s0 + $0x88] sm:$0xff]
  %v33 = vld [vmem:[%s0 + $0x90] sm:$0xff]
  %v34 = vld [vmem:[%s0 + $0x98] sm:$0xff]
  %v35 = vld [vmem:[%s0 + $0xa0] sm:$0xff]
  %v36 = vld [vmem:[%s0 + $0xa8] sm:$0xff]
  %v37 = vld [vmem:[%s0 + $0xb0] sm:$0xff]
  %v38 = vld [vmem:[%s0 + $0xb8] sm:$0xff]
  %v39 = vld [vmem:[%s1] sm:$0xf]
  %v40 = vld [vmem:[%s1 + $0x4] sm:$0xf]
  %v41 = vld [vmem:[%s1 + $0x8] sm:$0xf]
  %v42 = vld [vmem:[%s1 + $0xc] sm:$0xf]
  %v43 = vld [vmem:[%s1 + $0x10] sm:$0xf]
  %v44 = vld [vmem:[%s1 + $0x14] sm:$0xf]
  %v45 = vld [vmem:[%s1 + $0x18] sm:$0xf]
  %v46 = vld [vmem:[%s1 + $0x1c] sm:$0xf]
  %v47 = vld [vmem:[%s1 + $0x20] sm:$0xf]
  %v48 = vld [vmem:[%s1 + $0x24] sm:$0xf]
  %v49 = vld [vmem:[%s1 + $0x28] sm:$0xf]
  %v50 = vld [vmem:[%s1 + $0x2c] sm:$0xf]
  %v51 = vld [vmem:[%s1 + $0x30] sm:$0xf]
  %v52 = vld [vmem:[%s1 + $0x34] sm:$0xf]
  %v53 = vld [vmem:[%s1 + $0x38] sm:$0xf]
  %v54 = vld [vmem:[%s1 + $0x3c] sm:$0xf]
  %v55 = vld [vmem:[%s1 + $0x40] sm:$0xf]
  %v56 = vld [vmem:[%s1 + $0x44] sm:$0xf]
  %v57 = vld [vmem:[%s1 + $0x48] sm:$0xf]
  %v58 = vld [vmem:[%s1 + $0x4c] sm:$0xf]
  %v59 = vld [vmem:[%s1 + $0x50] sm:$0xf]
  %v60 = vld [vmem:[%s1 + $0x54] sm:$0xf]
  %v61 = vld [vmem:[%s1 + $0x58] sm:$0xf]
  %v62 = vld [vmem:[%s1 + $0x5c] sm:$0xf]
  %v63 = vld [vmem:[%s1 + $0x60] sm:$0xf]
  %v64 = vld [vmem:[%s1 + $0x64] sm:$0xf]
  %v65 = vld [vmem:[%s1 + $0x68] sm:$0xf]
  %v66 = vld [vmem:[%s1 + $0x6c] sm:$0xf]
  %v67 = vld [vmem:[%s1 + $0x70] sm:$0xf]
  %v68 = vld [vmem:[%s1 + $0x74] sm:$0xf]
  %v69 = vld [vmem:[%s1 + $0x78] sm:$0xf]
  %v70 = vld [vmem:[%s1 + $0x7c] sm:$0xf]
  %v71 = vld [vmem:[%s1 + $0x80] sm:$0xf]
  %v72 = vld [vmem:[%s1 + $0x84] sm:$0xf]
  %v73 = vld [vmem:[%s1 + $0x88] sm:$0xf]
  %v74 = vld [vmem:[%s1 + $0x8c] sm:$0xf]
  %v75 = vld [vmem:[%s1 + $0x90] sm:$0xf]
  %v76 = vld [vmem:[%s1 + $0x94] sm:$0xf]
  %v77 = vld [vmem:[%s1 + $0x98] sm:$0xf]
  %v78 = vld [vmem:[%s1 + $0x9c] sm:$0xf]
  %v79 = vld [vmem:[%s1 + $0xa0] sm:$0xf]
  %v80 = vld [vmem:[%s1 + $0xa4] sm:$0xf]
  %v81 = vld [vmem:[%s1 + $0xa8] sm:$0xf]
  %v82 = vld [vmem:[%s1 + $0xac] sm:$0xf]
  %v83 = vld [vmem:[%s1 + $0xb0] sm:$0xf]
  %v84 = vld [vmem:[%s1 + $0xb4] sm:$0xf]
  %v85 = vld [vmem:[%s1 + $0xb8] sm:$0xf]
  %v86 = vld [vmem:[%s1 + $0xbc] sm:$0xf]
  %v87 = vld [vmem:[%s1 + $0xc0] sm:$0xf]
  %v88 = vld [vmem:[%s1 + $0xc4] sm:$0xf]
  %v89 = vld [vmem:[%s1 + $0xc8] sm:$0xf]
  %v90 = vld [vmem:[%s1 + $0xcc] sm:$0xf]
  %v91 = vld [vmem:[%s1 + $0xd0] sm:$0xf]
  %v92 = vld [vmem:[%s1 + $0xd4] sm:$0xf]
  %v93 = vld [vmem:[%s1 + $0xd8] sm:$0xf]
  %v94 = vld [vmem:[%s1 + $0xdc] sm:$0xf]
  %v95 = vld [vmem:[%s1 + $0xe0] sm:$0xf]
  %v96 = vld [vmem:[%s1 + $0xe4] sm:$0xf]
  %v97 = vld [vmem:[%s1 + $0xe8] sm:$0xf]
  %v98 = vld [vmem:[%s1 + $0xec] sm:$0xf]
  %v99 = vld [vmem:[%s1 + $0xf0] sm:$0xf]
  %v100 = vld [vmem:[%s1 + $0xf4] sm:$0xf]
  %v101 = vld [vmem:[%s1 + $0xf8] sm:$0xf]
  %v102 = vld [vmem:[%s1 + $0xfc] sm:$0xf]
  %v103 = vld [vmem:[%s1 + $0x100] sm:$0xf]
  %v104 = vld [vmem:[%s1 + $0x104] sm:$0xf]
  %v105 = vld [vmem:[%s1 + $0x108] sm:$0xf]
  %v106 = vld [vmem:[%s1 + $0x10c] sm:$0xf]
  %v107 = vld [vmem:[%s1 + $0x110] sm:$0xf]
  %v108 = vld [vmem:[%s1 + $0x114] sm:$0xf]
  %v109 = vld [vmem:[%s1 + $0x118] sm:$0xf]
  %v110 = vld [vmem:[%s1 + $0x11c] sm:$0xf]
  %v111 = vld [vmem:[%s1 + $0x120] sm:$0xf]
  %v112 = vld [vmem:[%s1 + $0x124] sm:$0xf]
  %v113 = vld [vmem:[%s1 + $0x128] sm:$0xf]
  %v114 = vld [vmem:[%s1 + $0x12c] sm:$0xf]
  %v115 = vld [vmem:[%s1 + $0x130] sm:$0xf]
  %v116 = vld [vmem:[%s1 + $0x134] sm:$0xf]
  %v117 = vld [vmem:[%s1 + $0x138] sm:$0xf]
  %v118 = vld [vmem:[%s1 + $0x13c] sm:$0xf]
  %v119 = vld [vmem:[%s1 + $0x140] sm:$0xf]
  %v120 = vld [vmem:[%s1 + $0x144] sm:$0xf]
  %v121 = vld [vmem:[%s1 + $0x148] sm:$0xf]
  %v122 = vld [vmem:[%s1 + $0x14c] sm:$0xf]
  %v123 = vld [vmem:[%s1 + $0x150] sm:$0xf]
  %v124 = vld [vmem:[%s1 + $0x154] sm:$0xf]
  %v125 = vld [vmem:[%s1 + $0x158] sm:$0xf]
  %v126 = vld [vmem:[%s1 + $0x15c] sm:$0xf]
  %v127 = vld [vmem:[%s1 + $0x160] sm:$0xf]
  %v128 = vld [vmem:[%s1 + $0x164] sm:$0xf]
  %v129 = vld [vmem:[%s1 + $0x168] sm:$0xf]
  %v130 = vld [vmem:[%s1 + $0x16c] sm:$0xf]
  %v131 = vld [vmem:[%s1 + $0x170] sm:$0xf]
  %v132 = vld [vmem:[%s1 + $0x174] sm:$0xf]
  %v133 = vld [vmem:[%s1 + $0x178] sm:$0xf]
  %v134 = vld [vmem:[%s1 + $0x17c] sm:$0xf]
  %v135 = vld [vmem:[%s1 + $0x180] sm:$0xf]
  %v136 = vld [vmem:[%s1 + $0x184] sm:$0xf]
  %v137 = vld [vmem:[%s1 + $0x188] sm:$0xf]
  %v138 = vld [vmem:[%s1 + $0x18c] sm:$0xf]
  %v139 = vld [vmem:[%s1 + $0x190] sm:$0xf]
  %v140 = vld [vmem:[%s1 + $0x194] sm:$0xf]
  %v141 = vld [vmem:[%s1 + $0x198] sm:$0xf]
  %v142 = vld [vmem:[%s1 + $0x19c] sm:$0xf]
  %v143 = vld [vmem:[%s1 + $0x1a0] sm:$0xf]
  %v144 = vld [vmem:[%s1 + $0x1a4] sm:$0xf]
  %v145 = vld [vmem:[%s1 + $0x1a8] sm:$0xf]
  %v146 = vld [vmem:[%s1 + $0x1ac] sm:$0xf]
  %v147 = vld [vmem:[%s1 + $0x1b0] sm:$0xf]
  %v148 = vld [vmem:[%s1 + $0x1b4] sm:$0xf]
  %v149 = vld [vmem:[%s1 + $0x1b8] sm:$0xf]
  %v150 = vld [vmem:[%s1 + $0x1bc] sm:$0xf]
  %v151 = vld [vmem:[%s1 + $0x1c0] sm:$0xf]
  %v152 = vld [vmem:[%s1 + $0x1c4] sm:$0xf]
  %v153 = vld [vmem:[%s1 + $0x1c8] sm:$0xf]
  %v154 = vld [vmem:[%s1 + $0x1cc] sm:$0xf]
  %v155 = vld [vmem:[%s1 + $0x1d0] sm:$0xf]
  %v156 = vld [vmem:[%s1 + $0x1d4] sm:$0xf]
  %v157 = vld [vmem:[%s1 + $0x1d8] sm:$0xf]
  %v158 = vld [vmem:[%s1 + $0x1dc] sm:$0xf]
  %v159 = vld [vmem:[%s1 + $0x1e0] sm:$0xf]
  %v160 = vld [vmem:[%s1 + $0x1e4] sm:$0xf]
  %v161 = vld [vmem:[%s1 + $0x1e8] sm:$0xf]
  %v162 = vld [vmem:[%s1 + $0x1ec] sm:$0xf]
  %v163 = vld [vmem:[%s1 + $0x1f0] sm:$0xf]
  %v164 = vld [vmem:[%s1 + $0x1f4] sm:$0xf]
  %v165 = vld [vmem:[%s1 + $0x1f8] sm:$0xf]
  %v166 = vld [vmem:[%s1 + $0x1fc] sm:$0xf]
  %v167 = vld [vmem:[%s1 + $0x200] sm:$0xf]
  %v168 = vld [vmem:[%s1 + $0x204] sm:$0xf]
  %v169 = vld [vmem:[%s1 + $0x208] sm:$0xf]
  %v170 = vld [vmem:[%s1 + $0x20c] sm:$0xf]
  %v171 = vld [vmem:[%s1 + $0x210] sm:$0xf]
  %v172 = vld [vmem:[%s1 + $0x214] sm:$0xf]
  %v173 = vld [vmem:[%s1 + $0x218] sm:$0xf]
  %v174 = vld [vmem:[%s1 + $0x21c] sm:$0xf]
  %v175 = vld [vmem:[%s1 + $0x220] sm:$0xf]
  %v176 = vld [vmem:[%s1 + $0x224] sm:$0xf]
  %v177 = vld [vmem:[%s1 + $0x228] sm:$0xf]
  %v178 = vld [vmem:[%s1 + $0x22c] sm:$0xf]
  %v179 = vld [vmem:[%s1 + $0x230] sm:$0xf]
  %v180 = vld [vmem:[%s1 + $0x234] sm:$0xf]
  %v181 = vld [vmem:[%s1 + $0x238] sm:$0xf]
  %v182 = vld [vmem:[%s1 + $0x23c] sm:$0xf]
  %v183 = vld [vmem:[%s1 + $0x240] sm:$0xf]
  %v184 = vld [vmem:[%s1 + $0x244] sm:$0xf]
  %v185 = vld [vmem:[%s1 + $0x248] sm:$0xf]
  %v186 = vld [vmem:[%s1 + $0x24c] sm:$0xf]
  %v187 = vld [vmem:[%s1 + $0x250] sm:$0xf]
  %v188 = vld [vmem:[%s1 + $0x254] sm:$0xf]
  %v189 = vld [vmem:[%s1 + $0x258] sm:$0xf]
  %v190 = vld [vmem:[%s1 + $0x25c] sm:$0xf]
  %v191 = vld [vmem:[%s1 + $0x260] sm:$0xf]
  %v192 = vld [vmem:[%s1 + $0x264] sm:$0xf]
  %v193 = vld [vmem:[%s1 + $0x268] sm:$0xf]
  %v194 = vld [vmem:[%s1 + $0x26c] sm:$0xf]
  %v195 = vld [vmem:[%s1 + $0x270] sm:$0xf]
  %v196 = vld [vmem:[%s1 + $0x274] sm:$0xf]
  %v197 = vld [vmem:[%s1 + $0x278] sm:$0xf]
  %v198 = vld [vmem:[%s1 + $0x27c] sm:$0xf]
  %v199 = vld [vmem:[%s1 + $0x280] sm:$0xf]
  %v200 = vld [vmem:[%s1 + $0x284] sm:$0xf]
  %v201 = vld [vmem:[%s1 + $0x288] sm:$0xf]
  %v202 = vld [vmem:[%s1 + $0x28c] sm:$0xf]
  %v203 = vld [vmem:[%s1 + $0x290] sm:$0xf]
  %v204 = vld [vmem:[%s1 + $0x294] sm:$0xf]
  %v205 = vld [vmem:[%s1 + $0x298] sm:$0xf]
  %v206 = vld [vmem:[%s1 + $0x29c] sm:$0xf]
  %v207 = vld [vmem:[%s1 + $0x2a0] sm:$0xf]
  %v208 = vld [vmem:[%s1 + $0x2a4] sm:$0xf]
  %v209 = vld [vmem:[%s1 + $0x2a8] sm:$0xf]
  %v210 = vld [vmem:[%s1 + $0x2ac] sm:$0xf]
  %v211 = vld [vmem:[%s1 + $0x2b0] sm:$0xf]
  %v212 = vld [vmem:[%s1 + $0x2b4] sm:$0xf]
  %v213 = vld [vmem:[%s1 + $0x2b8] sm:$0xf]
  %v214 = vld [vmem:[%s1 + $0x2bc] sm:$0xf]
  %v215 = vld [vmem:[%s1 + $0x2c0] sm:$0xf]
  %v216 = vld [vmem:[%s1 + $0x2c4] sm:$0xf]
  %v217 = vld [vmem:[%s1 + $0x2c8] sm:$0xf]
  %v218 = vld [vmem:[%s1 + $0x2cc] sm:$0xf]
  %v219 = vld [vmem:[%s1 + $0x2d0] sm:$0xf]
  %v220 = vld [vmem:[%s1 + $0x2d4] sm:$0xf]
  %v221 = vld [vmem:[%s1 + $0x2d8] sm:$0xf]
  %v222 = vld [vmem:[%s1 + $0x2dc] sm:$0xf]
  %v223 = vld [vmem:[%s1 + $0x2e0] sm:$0xf]
  %v224 = vld [vmem:[%s1 + $0x2e4] sm:$0xf]
  %v225 = vld [vmem:[%s1 + $0x2e8] sm:$0xf]
  %v226 = vld [vmem:[%s1 + $0x2ec] sm:$0xf]
  %v227 = vld [vmem:[%s1 + $0x2f0] sm:$0xf]
  %v228 = vld [vmem:[%s1 + $0x2f4] sm:$0xf]
  %v229 = vld [vmem:[%s1 + $0x2f8] sm:$0xf]
  %v230 = vld [vmem:[%s1 + $0x2fc] sm:$0xf]
  %v231 = vld [vmem:[%s1 + $0x300] sm:$0xf]
  %v232 = vld [vmem:[%s1 + $0x304] sm:$0xf]
  %v233 = vld [vmem:[%s1 + $0x308] sm:$0xf]
  %v234 = vld [vmem:[%s1 + $0x30c] sm:$0xf]
  %v235 = vld [vmem:[%s1 + $0x310] sm:$0xf]
  %v236 = vld [vmem:[%s1 + $0x314] sm:$0xf]
  %v237 = vld [vmem:[%s1 + $0x318] sm:$0xf]
  %v238 = vld [vmem:[%s1 + $0x31c] sm:$0xf]
  %v239 = vld [vmem:[%s1 + $0x320] sm:$0xf]
  %v240 = vld [vmem:[%s1 + $0x324] sm:$0xf]
  %v241 = vld [vmem:[%s1 + $0x328] sm:$0xf]
  %v242 = vld [vmem:[%s1 + $0x32c] sm:$0xf]
  %v243 = vld [vmem:[%s1 + $0x330] sm:$0xf]
  %v244 = vld [vmem:[%s1 + $0x334] sm:$0xf]
  %v245 = vld [vmem:[%s1 + $0x338] sm:$0xf]
  %v246 = vld [vmem:[%s1 + $0x33c] sm:$0xf]
  %v247 = vld [vmem:[%s1 + $0x340] sm:$0xf]
  %v248 = vld [vmem:[%s1 + $0x344] sm:$0xf]
  %v249 = vld [vmem:[%s1 + $0x348] sm:$0xf]
  %v250 = vld [vmem:[%s1 + $0x34c] sm:$0xf]
  %v251 = vld [vmem:[%s1 + $0x350] sm:$0xf]
  %v252 = vld [vmem:[%s1 + $0x354] sm:$0xf]
  %v253 = vld [vmem:[%s1 + $0x358] sm:$0xf]
  %v254 = vld [vmem:[%s1 + $0x35c] sm:$0xf]
  %v255 = vld [vmem:[%s1 + $0x360] sm:$0xf]
  %v256 = vld [vmem:[%s1 + $0x364] sm:$0xf]
  %v257 = vld [vmem:[%s1 + $0x368] sm:$0xf]
  %v258 = vld [vmem:[%s1 + $0x36c] sm:$0xf]
  %v259 = vld [vmem:[%s1 + $0x370] sm:$0xf]
  %v260 = vld [vmem:[%s1 + $0x374] sm:$0xf]
  %v261 = vld [vmem:[%s1 + $0x378] sm:$0xf]
  %v262 = vld [vmem:[%s1 + $0x37c] sm:$0xf]
  %v263 = vld [vmem:[%s1 + $0x380] sm:$0xf]
  %v264 = vld [vmem:[%s1 + $0x384] sm:$0xf]
  %v265 = vld [vmem:[%s1 + $0x388] sm:$0xf]
  %v266 = vld [vmem:[%s1 + $0x38c] sm:$0xf]
  %v267 = vld [vmem:[%s1 + $0x390] sm:$0xf]
  %v268 = vld [vmem:[%s1 + $0x394] sm:$0xf]
  %v269 = vld [vmem:[%s1 + $0x398] sm:$0xf]
  %v270 = vld [vmem:[%s1 + $0x39c] sm:$0xf]
  %v271 = vld [vmem:[%s1 + $0x3a0] sm:$0xf]
  %v272 = vld [vmem:[%s1 + $0x3a4] sm:$0xf]
  %v273 = vld [vmem:[%s1 + $0x3a8] sm:$0xf]
  %v274 = vld [vmem:[%s1 + $0x3ac] sm:$0xf]
  %v275 = vld [vmem:[%s1 + $0x3b0] sm:$0xf]
  %v276 = vld [vmem:[%s1 + $0x3b4] sm:$0xf]
  %v277 = vld [vmem:[%s1 + $0x3b8] sm:$0xf]
  %v278 = vld [vmem:[%s1 + $0x3bc] sm:$0xf]
  %v279 = vld [vmem:[%s1 + $0x3c0] sm:$0xf]
  %v280 = vld [vmem:[%s1 + $0x3c4] sm:$0xf]
  %v281 = vld [vmem:[%s1 + $0x3c8] sm:$0xf]
  %v282 = vld [vmem:[%s1 + $0x3cc] sm:$0xf]
  %v283 = vld [vmem:[%s1 + $0x3d0] sm:$0xf]
  %v284 = vld [vmem:[%s1 + $0x3d4] sm:$0xf]
  %v285 = vld [vmem:[%s1 + $0x3d8] sm:$0xf]
  %v286 = vld [vmem:[%s1 + $0x3dc] sm:$0xf]
  %v287 = vld [vmem:[%s1 + $0x3e0] sm:$0xf]
  %v288 = vld [vmem:[%s1 + $0x3e4] sm:$0xf]
  %v289 = vld [vmem:[%s1 + $0x3e8] sm:$0xf]
  %v290 = vld [vmem:[%s1 + $0x3ec] sm:$0xf]
  %v291 = vld [vmem:[%s1 + $0x3f0] sm:$0xf]
  %v292 = vld [vmem:[%s1 + $0x3f4] sm:$0xf]
  %v293 = vld [vmem:[%s1 + $0x3f8] sm:$0xf]
  %v294 = vld [vmem:[%s1 + $0x3fc] sm:$0xf]
  %v295 = vld [vmem:[%s2] sm:$0x1]
  %v297 = vlaneseq
  %v298 = vshrl.u32 %v297, 7
  %v299 = vsub.s32 0, %v298
  %v300 = vrot.slane %v295, %v299
  %v326 = vunpack.c.l.b16 %v15
  %v327 = vunpack.c.h.b16 %v15
  %v328 = vunpack.c.l.b16 %v16
  %v329 = vunpack.c.h.b16 %v16
  %v330 = vunpack.c.l.b16 %v17
  %v331 = vunpack.c.h.b16 %v17
  %v332 = vunpack.c.l.b16 %v18
  %v333 = vunpack.c.h.b16 %v18
  %v334 = vunpack.c.l.b16 %v19
  %v335 = vunpack.c.h.b16 %v19
  %v336 = vunpack.c.l.b16 %v20
  %v337 = vunpack.c.h.b16 %v20
  %v338 = vunpack.c.l.b16 %v21
  %v339 = vunpack.c.h.b16 %v21
  %v340 = vunpack.c.l.b16 %v22
  %v341 = vunpack.c.h.b16 %v22
  %v342 = vunpack.c.l.b16 %v23
  %v343 = vunpack.c.h.b16 %v23
  %v344 = vunpack.c.l.b16 %v24
  %v345 = vunpack.c.h.b16 %v24
  %v346 = vunpack.c.l.b16 %v25
  %v347 = vunpack.c.h.b16 %v25
  %v348 = vunpack.c.l.b16 %v26
  %v349 = vunpack.c.h.b16 %v26
  %v350 = vunpack.c.l.b16 %v27
  %v351 = vunpack.c.h.b16 %v27
  %v352 = vunpack.c.l.b16 %v28
  %v353 = vunpack.c.h.b16 %v28
  %v354 = vunpack.c.l.b16 %v29
  %v355 = vunpack.c.h.b16 %v29
  %v356 = vunpack.c.l.b16 %v30
  %v357 = vunpack.c.h.b16 %v30
  %v358 = vunpack.c.l.b16 %v31
  %v359 = vunpack.c.h.b16 %v31
  %v360 = vunpack.c.l.b16 %v32
  %v361 = vunpack.c.h.b16 %v32
  %v362 = vunpack.c.l.b16 %v33
  %v363 = vunpack.c.h.b16 %v33
  %v364 = vunpack.c.l.b16 %v34
  %v365 = vunpack.c.h.b16 %v34
  %v366 = vunpack.c.l.b16 %v35
  %v367 = vunpack.c.h.b16 %v35
  %v368 = vunpack.c.l.b16 %v36
  %v369 = vunpack.c.h.b16 %v36
  %v370 = vunpack.c.l.b16 %v37
  %v371 = vunpack.c.h.b16 %v37
  %v372 = vunpack.c.l.b16 %v38
  %v373 = vunpack.c.h.b16 %v38
  %v374 = vpack.c.b16 %v342, %v326
  %v375 = vpack.c.b16 %v343, %v327
  %v376 = vpack.c.b16 %v344, %v328
  %v377 = vpack.c.b16 %v345, %v329
  %v378 = vpack.c.b16 %v346, %v330
  %v379 = vpack.c.b16 %v347, %v331
  %v380 = vpack.c.b16 %v348, %v332
  %v381 = vpack.c.b16 %v349, %v333
  %v382 = vpack.c.b16 %v350, %v334
  %v383 = vpack.c.b16 %v351, %v335
  %v384 = vpack.c.b16 %v352, %v336
  %v385 = vpack.c.b16 %v353, %v337
  %v386 = vpack.c.b16 %v354, %v338
  %v387 = vpack.c.b16 %v355, %v339
  %v388 = vpack.c.b16 %v356, %v340
  %v389 = vpack.c.b16 %v357, %v341
  %v390 = vpack.c.b16 %v358, %v358
  %v391 = vpack.c.b16 %v359, %v359
  %v392 = vpack.c.b16 %v360, %v360
  %v393 = vpack.c.b16 %v361, %v361
  %v394 = vpack.c.b16 %v362, %v362
  %v395 = vpack.c.b16 %v363, %v363
  %v396 = vpack.c.b16 %v364, %v364
  %v397 = vpack.c.b16 %v365, %v365
  %v398 = vpack.c.b16 %v366, %v366
  %v399 = vpack.c.b16 %v367, %v367
  %v400 = vpack.c.b16 %v368, %v368
  %v401 = vpack.c.b16 %v369, %v369
  %v402 = vpack.c.b16 %v370, %v370
  %v403 = vpack.c.b16 %v371, %v371
  %v404 = vpack.c.b16 %v372, %v372
  %v405 = vpack.c.b16 %v373, %v373
  %v694 = vunpack.c.l.b16 %v39
  %v695 = vunpack.c.l.b16 %v40
  %v696 = vunpack.c.l.b16 %v41
  %v697 = vunpack.c.l.b16 %v42
  %v698 = vunpack.c.l.b16 %v43
  %v699 = vunpack.c.l.b16 %v44
  %v700 = vunpack.c.l.b16 %v45
  %v701 = vunpack.c.l.b16 %v46
  %v702 = vunpack.c.l.b16 %v47
  %v703 = vunpack.c.l.b16 %v48
  %v704 = vunpack.c.l.b16 %v49
  %v705 = vunpack.c.l.b16 %v50
  %v706 = vunpack.c.l.b16 %v51
  %v707 = vunpack.c.l.b16 %v52
  %v708 = vunpack.c.l.b16 %v53
  %v709 = vunpack.c.l.b16 %v54
  %v710 = vunpack.c.l.b16 %v55
  %v711 = vunpack.c.l.b16 %v56
  %v712 = vunpack.c.l.b16 %v57
  %v713 = vunpack.c.l.b16 %v58
  %v714 = vunpack.c.l.b16 %v59
  %v715 = vunpack.c.l.b16 %v60
  %v716 = vunpack.c.l.b16 %v61
  %v717 = vunpack.c.l.b16 %v62
  %v718 = vunpack.c.l.b16 %v63
  %v719 = vunpack.c.l.b16 %v64
  %v720 = vunpack.c.l.b16 %v65
  %v721 = vunpack.c.l.b16 %v66
  %v722 = vunpack.c.l.b16 %v67
  %v723 = vunpack.c.l.b16 %v68
  %v724 = vunpack.c.l.b16 %v69
  %v725 = vunpack.c.l.b16 %v70
  %v726 = vunpack.c.l.b16 %v71
  %v727 = vunpack.c.l.b16 %v72
  %v728 = vunpack.c.l.b16 %v73
  %v729 = vunpack.c.l.b16 %v74
  %v730 = vunpack.c.l.b16 %v75
  %v731 = vunpack.c.l.b16 %v76
  %v732 = vunpack.c.l.b16 %v77
  %v733 = vunpack.c.l.b16 %v78
  %v734 = vunpack.c.l.b16 %v79
  %v735 = vunpack.c.l.b16 %v80
  %v736 = vunpack.c.l.b16 %v81
  %v737 = vunpack.c.l.b16 %v82
  %v738 = vunpack.c.l.b16 %v83
  %v739 = vunpack.c.l.b16 %v84
  %v740 = vunpack.c.l.b16 %v85
  %v741 = vunpack.c.l.b16 %v86
  %v742 = vunpack.c.l.b16 %v87
  %v743 = vunpack.c.l.b16 %v88
  %v744 = vunpack.c.l.b16 %v89
  %v745 = vunpack.c.l.b16 %v90
  %v746 = vunpack.c.l.b16 %v91
  %v747 = vunpack.c.l.b16 %v92
  %v748 = vunpack.c.l.b16 %v93
  %v749 = vunpack.c.l.b16 %v94
  %v750 = vunpack.c.l.b16 %v95
  %v751 = vunpack.c.l.b16 %v96
  %v752 = vunpack.c.l.b16 %v97
  %v753 = vunpack.c.l.b16 %v98
  %v754 = vunpack.c.l.b16 %v99
  %v755 = vunpack.c.l.b16 %v100
  %v756 = vunpack.c.l.b16 %v101
  %v757 = vunpack.c.l.b16 %v102
  %v758 = vunpack.c.l.b16 %v103
  %v759 = vunpack.c.l.b16 %v104
  %v760 = vunpack.c.l.b16 %v105
  %v761 = vunpack.c.l.b16 %v106
  %v762 = vunpack.c.l.b16 %v107
  %v763 = vunpack.c.l.b16 %v108
  %v764 = vunpack.c.l.b16 %v109
  %v765 = vunpack.c.l.b16 %v110
  %v766 = vunpack.c.l.b16 %v111
  %v767 = vunpack.c.l.b16 %v112
  %v768 = vunpack.c.l.b16 %v113
  %v769 = vunpack.c.l.b16 %v114
  %v770 = vunpack.c.l.b16 %v115
  %v771 = vunpack.c.l.b16 %v116
  %v772 = vunpack.c.l.b16 %v117
  %v773 = vunpack.c.l.b16 %v118
  %v774 = vunpack.c.l.b16 %v119
  %v775 = vunpack.c.l.b16 %v120
  %v776 = vunpack.c.l.b16 %v121
  %v777 = vunpack.c.l.b16 %v122
  %v778 = vunpack.c.l.b16 %v123
  %v779 = vunpack.c.l.b16 %v124
  %v780 = vunpack.c.l.b16 %v125
  %v781 = vunpack.c.l.b16 %v126
  %v782 = vunpack.c.l.b16 %v127
  %v783 = vunpack.c.l.b16 %v128
  %v784 = vunpack.c.l.b16 %v129
  %v785 = vunpack.c.l.b16 %v130
  %v786 = vunpack.c.l.b16 %v131
  %v787 = vunpack.c.l.b16 %v132
  %v788 = vunpack.c.l.b16 %v133
  %v789 = vunpack.c.l.b16 %v134
  %v790 = vunpack.c.l.b16 %v135
  %v791 = vunpack.c.l.b16 %v136
  %v792 = vunpack.c.l.b16 %v137
  %v793 = vunpack.c.l.b16 %v138
  %v794 = vunpack.c.l.b16 %v139
  %v795 = vunpack.c.l.b16 %v140
  %v796 = vunpack.c.l.b16 %v141
  %v797 = vunpack.c.l.b16 %v142
  %v798 = vunpack.c.l.b16 %v143
  %v799 = vunpack.c.l.b16 %v144
  %v800 = vunpack.c.l.b16 %v145
  %v801 = vunpack.c.l.b16 %v146
  %v802 = vunpack.c.l.b16 %v147
  %v803 = vunpack.c.l.b16 %v148
  %v804 = vunpack.c.l.b16 %v149
  %v805 = vunpack.c.l.b16 %v150
  %v806 = vunpack.c.l.b16 %v151
  %v807 = vunpack.c.l.b16 %v152
  %v808 = vunpack.c.l.b16 %v153
  %v809 = vunpack.c.l.b16 %v154
  %v810 = vunpack.c.l.b16 %v155
  %v811 = vunpack.c.l.b16 %v156
  %v812 = vunpack.c.l.b16 %v157
  %v813 = vunpack.c.l.b16 %v158
  %v814 = vunpack.c.l.b16 %v159
  %v815 = vunpack.c.l.b16 %v160
  %v816 = vunpack.c.l.b16 %v161
  %v817 = vunpack.c.l.b16 %v162
  %v818 = vunpack.c.l.b16 %v163
  %v819 = vunpack.c.l.b16 %v164
  %v820 = vunpack.c.l.b16 %v165
  %v821 = vunpack.c.l.b16 %v166
  %v822 = vunpack.c.l.b16 %v167
  %v823 = vunpack.c.l.b16 %v168
  %v824 = vunpack.c.l.b16 %v169
  %v825 = vunpack.c.l.b16 %v170
  %v826 = vunpack.c.l.b16 %v171
  %v827 = vunpack.c.l.b16 %v172
  %v828 = vunpack.c.l.b16 %v173
  %v829 = vunpack.c.l.b16 %v174
  %v830 = vunpack.c.l.b16 %v175
  %v831 = vunpack.c.l.b16 %v176
  %v832 = vunpack.c.l.b16 %v177
  %v833 = vunpack.c.l.b16 %v178
  %v834 = vunpack.c.l.b16 %v179
  %v835 = vunpack.c.l.b16 %v180
  %v836 = vunpack.c.l.b16 %v181
  %v837 = vunpack.c.l.b16 %v182
  %v838 = vunpack.c.l.b16 %v183
  %v839 = vunpack.c.l.b16 %v184
  %v840 = vunpack.c.l.b16 %v185
  %v841 = vunpack.c.l.b16 %v186
  %v842 = vunpack.c.l.b16 %v187
  %v843 = vunpack.c.l.b16 %v188
  %v844 = vunpack.c.l.b16 %v189
  %v845 = vunpack.c.l.b16 %v190
  %v846 = vunpack.c.l.b16 %v191
  %v847 = vunpack.c.l.b16 %v192
  %v848 = vunpack.c.l.b16 %v193
  %v849 = vunpack.c.l.b16 %v194
  %v850 = vunpack.c.l.b16 %v195
  %v851 = vunpack.c.l.b16 %v196
  %v852 = vunpack.c.l.b16 %v197
  %v853 = vunpack.c.l.b16 %v198
  %v854 = vunpack.c.l.b16 %v199
  %v855 = vunpack.c.l.b16 %v200
  %v856 = vunpack.c.l.b16 %v201
  %v857 = vunpack.c.l.b16 %v202
  %v858 = vunpack.c.l.b16 %v203
  %v859 = vunpack.c.l.b16 %v204
  %v860 = vunpack.c.l.b16 %v205
  %v861 = vunpack.c.l.b16 %v206
  %v862 = vunpack.c.l.b16 %v207
  %v863 = vunpack.c.l.b16 %v208
  %v864 = vunpack.c.l.b16 %v209
  %v865 = vunpack.c.l.b16 %v210
  %v866 = vunpack.c.l.b16 %v211
  %v867 = vunpack.c.l.b16 %v212
  %v868 = vunpack.c.l.b16 %v213
  %v869 = vunpack.c.l.b16 %v214
  %v870 = vunpack.c.l.b16 %v215
  %v871 = vunpack.c.l.b16 %v216
  %v872 = vunpack.c.l.b16 %v217
  %v873 = vunpack.c.l.b16 %v218
  %v874 = vunpack.c.l.b16 %v219
  %v875 = vunpack.c.l.b16 %v220
  %v876 = vunpack.c.l.b16 %v221
  %v877 = vunpack.c.l.b16 %v222
  %v878 = vunpack.c.l.b16 %v223
  %v879 = vunpack.c.l.b16 %v224
  %v880 = vunpack.c.l.b16 %v225
  %v881 = vunpack.c.l.b16 %v226
  %v882 = vunpack.c.l.b16 %v227
  %v883 = vunpack.c.l.b16 %v228
  %v884 = vunpack.c.l.b16 %v229
  %v885 = vunpack.c.l.b16 %v230
  %v886 = vunpack.c.l.b16 %v231
  %v887 = vunpack.c.l.b16 %v232
  %v888 = vunpack.c.l.b16 %v233
  %v889 = vunpack.c.l.b16 %v234
  %v890 = vunpack.c.l.b16 %v235
  %v891 = vunpack.c.l.b16 %v236
  %v892 = vunpack.c.l.b16 %v237
  %v893 = vunpack.c.l.b16 %v238
  %v894 = vunpack.c.l.b16 %v239
  %v895 = vunpack.c.l.b16 %v240
  %v896 = vunpack.c.l.b16 %v241
  %v897 = vunpack.c.l.b16 %v242
  %v898 = vunpack.c.l.b16 %v243
  %v899 = vunpack.c.l.b16 %v244
  %v900 = vunpack.c.l.b16 %v245
  %v901 = vunpack.c.l.b16 %v246
  %v902 = vunpack.c.l.b16 %v247
  %v903 = vunpack.c.l.b16 %v248
  %v904 = vunpack.c.l.b16 %v249
  %v905 = vunpack.c.l.b16 %v250
  %v906 = vunpack.c.l.b16 %v251
  %v907 = vunpack.c.l.b16 %v252
  %v908 = vunpack.c.l.b16 %v253
  %v909 = vunpack.c.l.b16 %v254
  %v910 = vunpack.c.l.b16 %v255
  %v911 = vunpack.c.l.b16 %v256
  %v912 = vunpack.c.l.b16 %v257
  %v913 = vunpack.c.l.b16 %v258
  %v914 = vunpack.c.l.b16 %v259
  %v915 = vunpack.c.l.b16 %v260
  %v916 = vunpack.c.l.b16 %v261
  %v917 = vunpack.c.l.b16 %v262
  %v918 = vunpack.c.l.b16 %v263
  %v919 = vunpack.c.l.b16 %v264
  %v920 = vunpack.c.l.b16 %v265
  %v921 = vunpack.c.l.b16 %v266
  %v922 = vunpack.c.l.b16 %v267
  %v923 = vunpack.c.l.b16 %v268
  %v924 = vunpack.c.l.b16 %v269
  %v925 = vunpack.c.l.b16 %v270
  %v926 = vunpack.c.l.b16 %v271
  %v927 = vunpack.c.l.b16 %v272
  %v928 = vunpack.c.l.b16 %v273
  %v929 = vunpack.c.l.b16 %v274
  %v930 = vunpack.c.l.b16 %v275
  %v931 = vunpack.c.l.b16 %v276
  %v932 = vunpack.c.l.b16 %v277
  %v933 = vunpack.c.l.b16 %v278
  %v934 = vunpack.c.l.b16 %v279
  %v935 = vunpack.c.l.b16 %v280
  %v936 = vunpack.c.l.b16 %v281
  %v937 = vunpack.c.l.b16 %v282
  %v938 = vunpack.c.l.b16 %v283
  %v939 = vunpack.c.l.b16 %v284
  %v940 = vunpack.c.l.b16 %v285
  %v941 = vunpack.c.l.b16 %v286
  %v942 = vunpack.c.l.b16 %v287
  %v943 = vunpack.c.l.b16 %v288
  %v944 = vunpack.c.l.b16 %v289
  %v945 = vunpack.c.l.b16 %v290
  %v946 = vunpack.c.l.b16 %v291
  %v947 = vunpack.c.l.b16 %v292
  %v948 = vunpack.c.l.b16 %v293
  %v949 = vunpack.c.l.b16 %v294
  %v950 = vpack.c.b16 %v695, %v694
  %v951 = vpack.c.b16 %v697, %v696
  %v952 = vpack.c.b16 %v699, %v698
  %v953 = vpack.c.b16 %v701, %v700
  %v954 = vpack.c.b16 %v703, %v702
  %v955 = vpack.c.b16 %v705, %v704
  %v956 = vpack.c.b16 %v707, %v706
  %v957 = vpack.c.b16 %v709, %v708
  %v958 = vpack.c.b16 %v711, %v710
  %v959 = vpack.c.b16 %v713, %v712
  %v960 = vpack.c.b16 %v715, %v714
  %v961 = vpack.c.b16 %v717, %v716
  %v962 = vpack.c.b16 %v719, %v718
  %v963 = vpack.c.b16 %v721, %v720
  %v964 = vpack.c.b16 %v723, %v722
  %v965 = vpack.c.b16 %v725, %v724
  %v966 = vpack.c.b16 %v727, %v726
  %v967 = vpack.c.b16 %v729, %v728
  %v968 = vpack.c.b16 %v731, %v730
  %v969 = vpack.c.b16 %v733, %v732
  %v970 = vpack.c.b16 %v735, %v734
  %v971 = vpack.c.b16 %v737, %v736
  %v972 = vpack.c.b16 %v739, %v738
  %v973 = vpack.c.b16 %v741, %v740
  %v974 = vpack.c.b16 %v743, %v742
  %v975 = vpack.c.b16 %v745, %v744
  %v976 = vpack.c.b16 %v747, %v746
  %v977 = vpack.c.b16 %v749, %v748
  %v978 = vpack.c.b16 %v751, %v750
  %v979 = vpack.c.b16 %v753, %v752
  %v980 = vpack.c.b16 %v755, %v754
  %v981 = vpack.c.b16 %v757, %v756
  %v982 = vpack.c.b16 %v759, %v758
  %v983 = vpack.c.b16 %v761, %v760
  %v984 = vpack.c.b16 %v763, %v762
  %v985 = vpack.c.b16 %v765, %v764
  %v986 = vpack.c.b16 %v767, %v766
  %v987 = vpack.c.b16 %v769, %v768
  %v988 = vpack.c.b16 %v771, %v770
  %v989 = vpack.c.b16 %v773, %v772
  %v990 = vpack.c.b16 %v775, %v774
  %v991 = vpack.c.b16 %v777, %v776
  %v992 = vpack.c.b16 %v779, %v778
  %v993 = vpack.c.b16 %v781, %v780
  %v994 = vpack.c.b16 %v783, %v782
  %v995 = vpack.c.b16 %v785, %v784
  %v996 = vpack.c.b16 %v787, %v786
  %v997 = vpack.c.b16 %v789, %v788
  %v998 = vpack.c.b16 %v791, %v790
  %v999 = vpack.c.b16 %v793, %v792
  %v1000 = vpack.c.b16 %v795, %v794
  %v1001 = vpack.c.b16 %v797, %v796
  %v1002 = vpack.c.b16 %v799, %v798
  %v1003 = vpack.c.b16 %v801, %v800
  %v1004 = vpack.c.b16 %v803, %v802
  %v1005 = vpack.c.b16 %v805, %v804
  %v1006 = vpack.c.b16 %v807, %v806
  %v1007 = vpack.c.b16 %v809, %v808
  %v1008 = vpack.c.b16 %v811, %v810
  %v1009 = vpack.c.b16 %v813, %v812
  %v1010 = vpack.c.b16 %v815, %v814
  %v1011 = vpack.c.b16 %v817, %v816
  %v1012 = vpack.c.b16 %v819, %v818
  %v1013 = vpack.c.b16 %v821, %v820
  %v1014 = vpack.c.b16 %v823, %v822
  %v1015 = vpack.c.b16 %v825, %v824
  %v1016 = vpack.c.b16 %v827, %v826
  %v1017 = vpack.c.b16 %v829, %v828
  %v1018 = vpack.c.b16 %v831, %v830
  %v1019 = vpack.c.b16 %v833, %v832
  %v1020 = vpack.c.b16 %v835, %v834
  %v1021 = vpack.c.b16 %v837, %v836
  %v1022 = vpack.c.b16 %v839, %v838
  %v1023 = vpack.c.b16 %v841, %v840
  %v1024 = vpack.c.b16 %v843, %v842
  %v1025 = vpack.c.b16 %v845, %v844
  %v1026 = vpack.c.b16 %v847, %v846
  %v1027 = vpack.c.b16 %v849, %v848
  %v1028 = vpack.c.b16 %v851, %v850
  %v1029 = vpack.c.b16 %v853, %v852
  %v1030 = vpack.c.b16 %v855, %v854
  %v1031 = vpack.c.b16 %v857, %v856
  %v1032 = vpack.c.b16 %v859, %v858
  %v1033 = vpack.c.b16 %v861, %v860
  %v1034 = vpack.c.b16 %v863, %v862
  %v1035 = vpack.c.b16 %v865, %v864
  %v1036 = vpack.c.b16 %v867, %v866
  %v1037 = vpack.c.b16 %v869, %v868
  %v1038 = vpack.c.b16 %v871, %v870
  %v1039 = vpack.c.b16 %v873, %v872
  %v1040 = vpack.c.b16 %v875, %v874
  %v1041 = vpack.c.b16 %v877, %v876
  %v1042 = vpack.c.b16 %v879, %v878
  %v1043 = vpack.c.b16 %v881, %v880
  %v1044 = vpack.c.b16 %v883, %v882
  %v1045 = vpack.c.b16 %v885, %v884
  %v1046 = vpack.c.b16 %v887, %v886
  %v1047 = vpack.c.b16 %v889, %v888
  %v1048 = vpack.c.b16 %v891, %v890
  %v1049 = vpack.c.b16 %v893, %v892
  %v1050 = vpack.c.b16 %v895, %v894
  %v1051 = vpack.c.b16 %v897, %v896
  %v1052 = vpack.c.b16 %v899, %v898
  %v1053 = vpack.c.b16 %v901, %v900
  %v1054 = vpack.c.b16 %v903, %v902
  %v1055 = vpack.c.b16 %v905, %v904
  %v1056 = vpack.c.b16 %v907, %v906
  %v1057 = vpack.c.b16 %v909, %v908
  %v1058 = vpack.c.b16 %v911, %v910
  %v1059 = vpack.c.b16 %v913, %v912
  %v1060 = vpack.c.b16 %v915, %v914
  %v1061 = vpack.c.b16 %v917, %v916
  %v1062 = vpack.c.b16 %v919, %v918
  %v1063 = vpack.c.b16 %v921, %v920
  %v1064 = vpack.c.b16 %v923, %v922
  %v1065 = vpack.c.b16 %v925, %v924
  %v1066 = vpack.c.b16 %v927, %v926
  %v1067 = vpack.c.b16 %v929, %v928
  %v1068 = vpack.c.b16 %v931, %v930
  %v1069 = vpack.c.b16 %v933, %v932
  %v1070 = vpack.c.b16 %v935, %v934
  %v1071 = vpack.c.b16 %v937, %v936
  %v1072 = vpack.c.b16 %v939, %v938
  %v1073 = vpack.c.b16 %v941, %v940
  %v1074 = vpack.c.b16 %v943, %v942
  %v1075 = vpack.c.b16 %v945, %v944
  %v1076 = vpack.c.b16 %v947, %v946
  %v1077 = vpack.c.b16 %v949, %v948
  %1206 = vmatprep.subr.bf16.mxu0 0
  %1207 = vmatpush1.bf16.msra.mxu0 %v950
  %1208 = vmatprep.subr.bf16.mxu0 0
  %1209 = vmatpush1.bf16.msra.mxu0 %v951
  %1210 = vmatprep.subr.bf16.mxu0 0
  %1211 = vmatpush1.bf16.msra.mxu0 %v952
  %1212 = vmatprep.subr.bf16.mxu0 0
  %1213 = vmatpush1.bf16.msra.mxu0 %v953
  %1214 = vmatprep.subr.bf16.mxu0 0
  %1215 = vmatpush1.bf16.msra.mxu0 %v954
  %1216 = vmatprep.subr.bf16.mxu0 0
  %1217 = vmatpush1.bf16.msra.mxu0 %v955
  %1218 = vmatprep.subr.bf16.mxu0 0
  %1219 = vmatpush1.bf16.msra.mxu0 %v956
  %1220 = vmatprep.subr.bf16.mxu0 0
  %1221 = vmatpush1.bf16.msra.mxu0 %v957
  %1222 = vmatprep.subr.bf16.mxu0 0
  %1223 = vmatpush1.bf16.msra.mxu0 %v958
  %1224 = vmatprep.subr.bf16.mxu0 0
  %1225 = vmatpush1.bf16.msra.mxu0 %v959
  %1226 = vmatprep.subr.bf16.mxu0 0
  %1227 = vmatpush1.bf16.msra.mxu0 %v960
  %1228 = vmatprep.subr.bf16.mxu0 0
  %1229 = vmatpush1.bf16.msra.mxu0 %v961
  %1230 = vmatprep.subr.bf16.mxu0 0
  %1231 = vmatpush1.bf16.msra.mxu0 %v962
  %1232 = vmatprep.subr.bf16.mxu0 0
  %1233 = vmatpush1.bf16.msra.mxu0 %v963
  %1234 = vmatprep.subr.bf16.mxu0 0
  %1235 = vmatpush1.bf16.msra.mxu0 %v964
  %1236 = vmatprep.subr.bf16.mxu0 0
  %1237 = vmatpush1.bf16.msra.mxu0 %v965
  %1238 = vmatprep.mubr.bf16.mxu0 %v375
  %1239 = vmatmul.mubr.bf16.gmra.mrb[0].mxu0 %v374
  %v1240 = vpop.f32.mrb[0].mxu0
  %v1241 = vadd.f32 %v300, %v1240
  %v1242 = vpop.f32.mrb[0].mxu0
  %v1243 = vpop.f32.mrb[0].mxu0
  %v1244 = vadd.f32 %v300, %v1243
  %v1245 = vpop.f32.mrb[0].mxu0
  %1246 = vmatprep.mubr.bf16.mxu0 %v391
  %1247 = vmatmul.mubr.bf16.gmra.mrb[0].mxu0 %v390
  %v1248 = vpop.f32.mrb[0].mxu0
  %v1249 = vadd.f32 %v300, %v1248
  %v1250 = vpop.f32.mrb[0].mxu0
  %v1251 = vpop.f32.mrb[0].mxu0
  %v1252 = vpop.f32.mrb[0].mxu0
  %1253 = vdwg.mxu0
  %1254 = vmatprep.subr.bf16.mxu0 0
  %1255 = vmatpush1.bf16.msra.mxu0 %v966
  %1256 = vmatprep.subr.bf16.mxu0 0
  %1257 = vmatpush1.bf16.msra.mxu0 %v967
  %1258 = vmatprep.subr.bf16.mxu0 0
  %1259 = vmatpush1.bf16.msra.mxu0 %v968
  %1260 = vmatprep.subr.bf16.mxu0 0
  %1261 = vmatpush1.bf16.msra.mxu0 %v969
  %1262 = vmatprep.subr.bf16.mxu0 0
  %1263 = vmatpush1.bf16.msra.mxu0 %v970
  %1264 = vmatprep.subr.bf16.mxu0 0
  %1265 = vmatpush1.bf16.msra.mxu0 %v971
  %1266 = vmatprep.subr.bf16.mxu0 0
  %1267 = vmatpush1.bf16.msra.mxu0 %v972
  %1268 = vmatprep.subr.bf16.mxu0 0
  %1269 = vmatpush1.bf16.msra.mxu0 %v973
  %1270 = vmatprep.subr.bf16.mxu0 0
  %1271 = vmatpush1.bf16.msra.mxu0 %v974
  %1272 = vmatprep.subr.bf16.mxu0 0
  %1273 = vmatpush1.bf16.msra.mxu0 %v975
  %1274 = vmatprep.subr.bf16.mxu0 0
  %1275 = vmatpush1.bf16.msra.mxu0 %v976
  %1276 = vmatprep.subr.bf16.mxu0 0
  %1277 = vmatpush1.bf16.msra.mxu0 %v977
  %1278 = vmatprep.subr.bf16.mxu0 0
  %1279 = vmatpush1.bf16.msra.mxu0 %v978
  %1280 = vmatprep.subr.bf16.mxu0 0
  %1281 = vmatpush1.bf16.msra.mxu0 %v979
  %1282 = vmatprep.subr.bf16.mxu0 0
  %1283 = vmatpush1.bf16.msra.mxu0 %v980
  %1284 = vmatprep.subr.bf16.mxu0 0
  %1285 = vmatpush1.bf16.msra.mxu0 %v981
  %1286 = vmatprep.mubr.bf16.mxu0 %v377
  %1287 = vmatmul.mubr.bf16.gmra.mrb[0].mxu0 %v376
  %v1288 = vpop.f32.mrb[0].mxu0
  %v1289 = vadd.f32 %v1241, %v1288
  %v1290 = vpop.f32.mrb[0].mxu0
  %v1291 = vpop.f32.mrb[0].mxu0
  %v1292 = vadd.f32 %v1244, %v1291
  %v1293 = vpop.f32.mrb[0].mxu0
  %1294 = vmatprep.mubr.bf16.mxu0 %v393
  %1295 = vmatmul.mubr.bf16.gmra.mrb[0].mxu0 %v392
  %v1296 = vpop.f32.mrb[0].mxu0
  %v1297 = vadd.f32 %v1249, %v1296
  %v1298 = vpop.f32.mrb[0].mxu0
  %v1299 = vpop.f32.mrb[0].mxu0
  %v1300 = vpop.f32.mrb[0].mxu0
  %1301 = vdwg.mxu0
  %1302 = vmatprep.subr.bf16.mxu0 0
  %1303 = vmatpush1.bf16.msra.mxu0 %v982
  %1304 = vmatprep.subr.bf16.mxu0 0
  %1305 = vmatpush1.bf16.msra.mxu0 %v983
  %1306 = vmatprep.subr.bf16.mxu0 0
  %1307 = vmatpush1.bf16.msra.mxu0 %v984
  %1308 = vmatprep.subr.bf16.mxu0 0
  %1309 = vmatpush1.bf16.msra.mxu0 %v985
  %1310 = vmatprep.subr.bf16.mxu0 0
  %1311 = vmatpush1.bf16.msra.mxu0 %v986
  %1312 = vmatprep.subr.bf16.mxu0 0
  %1313 = vmatpush1.bf16.msra.mxu0 %v987
  %1314 = vmatprep.subr.bf16.mxu0 0
  %1315 = vmatpush1.bf16.msra.mxu0 %v988
  %1316 = vmatprep.subr.bf16.mxu0 0
  %1317 = vmatpush1.bf16.msra.mxu0 %v989
  %1318 = vmatprep.subr.bf16.mxu0 0
  %1319 = vmatpush1.bf16.msra.mxu0 %v990
  %1320 = vmatprep.subr.bf16.mxu0 0
  %1321 = vmatpush1.bf16.msra.mxu0 %v991
  %1322 = vmatprep.subr.bf16.mxu0 0
  %1323 = vmatpush1.bf16.msra.mxu0 %v992
  %1324 = vmatprep.subr.bf16.mxu0 0
  %1325 = vmatpush1.bf16.msra.mxu0 %v993
  %1326 = vmatprep.subr.bf16.mxu0 0
  %1327 = vmatpush1.bf16.msra.mxu0 %v994
  %1328 = vmatprep.subr.bf16.mxu0 0
  %1329 = vmatpush1.bf16.msra.mxu0 %v995
  %1330 = vmatprep.subr.bf16.mxu0 0
  %1331 = vmatpush1.bf16.msra.mxu0 %v996
  %1332 = vmatprep.subr.bf16.mxu0 0
  %1333 = vmatpush1.bf16.msra.mxu0 %v997
  %1334 = vmatprep.mubr.bf16.mxu0 %v379
  %1335 = vmatmul.mubr.bf16.gmra.mrb[0].mxu0 %v378
  %v1336 = vpop.f32.mrb[0].mxu0
  %v1337 = vadd.f32 %v1289, %v1336
  %v1338 = vpop.f32.mrb[0].mxu0
  %v1339 = vpop.f32.mrb[0].mxu0
  %v1340 = vadd.f32 %v1292, %v1339
  %v1341 = vpop.f32.mrb[0].mxu0
  %1342 = vmatprep.mubr.bf16.mxu0 %v395
  %1343 = vmatmul.mubr.bf16.gmra.mrb[0].mxu0 %v394
  %v1344 = vpop.f32.mrb[0].mxu0
  %v1345 = vadd.f32 %v1297, %v1344
  %v1346 = vpop.f32.mrb[0].mxu0
  %v1347 = vpop.f32.mrb[0].mxu0
  %v1348 = vpop.f32.mrb[0].mxu0
  %1349 = vdwg.mxu0
  %1350 = vmatprep.subr.bf16.mxu0 0
  %1351 = vmatpush1.bf16.msra.mxu0 %v998
  %1352 = vmatprep.subr.bf16.mxu0 0
  %1353 = vmatpush1.bf16.msra.mxu0 %v999
  %1354 = vmatprep.subr.bf16.mxu0 0
  %1355 = vmatpush1.bf16.msra.mxu0 %v1000
  %1356 = vmatprep.subr.bf16.mxu0 0
  %1357 = vmatpush1.bf16.msra.mxu0 %v1001
  %1358 = vmatprep.subr.bf16.mxu0 0
  %1359 = vmatpush1.bf16.msra.mxu0 %v1002
  %1360 = vmatprep.subr.bf16.mxu0 0
  %1361 = vmatpush1.bf16.msra.mxu0 %v1003
  %1362 = vmatprep.subr.bf16.mxu0 0
  %1363 = vmatpush1.bf16.msra.mxu0 %v1004
  %1364 = vmatprep.subr.bf16.mxu0 0
  %1365 = vmatpush1.bf16.msra.mxu0 %v1005
  %1366 = vmatprep.subr.bf16.mxu0 0
  %1367 = vmatpush1.bf16.msra.mxu0 %v1006
  %1368 = vmatprep.subr.bf16.mxu0 0
  %1369 = vmatpush1.bf16.msra.mxu0 %v1007
  %1370 = vmatprep.subr.bf16.mxu0 0
  %1371 = vmatpush1.bf16.msra.mxu0 %v1008
  %1372 = vmatprep.subr.bf16.mxu0 0
  %1373 = vmatpush1.bf16.msra.mxu0 %v1009
  %1374 = vmatprep.subr.bf16.mxu0 0
  %1375 = vmatpush1.bf16.msra.mxu0 %v1010
  %1376 = vmatprep.subr.bf16.mxu0 0
  %1377 = vmatpush1.bf16.msra.mxu0 %v1011
  %1378 = vmatprep.subr.bf16.mxu0 0
  %1379 = vmatpush1.bf16.msra.mxu0 %v1012
  %1380 = vmatprep.subr.bf16.mxu0 0
  %1381 = vmatpush1.bf16.msra.mxu0 %v1013
  %1382 = vmatprep.mubr.bf16.mxu0 %v381
  %1383 = vmatmul.mubr.bf16.gmra.mrb[0].mxu0 %v380
  %v1384 = vpop.f32.mrb[0].mxu0
  %v1385 = vadd.f32 %v1337, %v1384
  %v1386 = vpop.f32.mrb[0].mxu0
  %v1387 = vpop.f32.mrb[0].mxu0
  %v1388 = vadd.f32 %v1340, %v1387
  %v1389 = vpop.f32.mrb[0].mxu0
  %1390 = vmatprep.mubr.bf16.mxu0 %v397
  %1391 = vmatmul.mubr.bf16.gmra.mrb[0].mxu0 %v396
  %v1392 = vpop.f32.mrb[0].mxu0
  %v1393 = vadd.f32 %v1345, %v1392
  %v1394 = vpop.f32.mrb[0].mxu0
  %v1395 = vpop.f32.mrb[0].mxu0
  %v1396 = vpop.f32.mrb[0].mxu0
  %1397 = vdwg.mxu0
  %1398 = vmatprep.subr.bf16.mxu0 0
  %1399 = vmatpush1.bf16.msra.mxu0 %v1014
  %1400 = vmatprep.subr.bf16.mxu0 0
  %1401 = vmatpush1.bf16.msra.mxu0 %v1015
  %1402 = vmatprep.subr.bf16.mxu0 0
  %1403 = vmatpush1.bf16.msra.mxu0 %v1016
  %1404 = vmatprep.subr.bf16.mxu0 0
  %1405 = vmatpush1.bf16.msra.mxu0 %v1017
  %1406 = vmatprep.subr.bf16.mxu0 0
  %1407 = vmatpush1.bf16.msra.mxu0 %v1018
  %1408 = vmatprep.subr.bf16.mxu0 0
  %1409 = vmatpush1.bf16.msra.mxu0 %v1019
  %1410 = vmatprep.subr.bf16.mxu0 0
  %1411 = vmatpush1.bf16.msra.mxu0 %v1020
  %1412 = vmatprep.subr.bf16.mxu0 0
  %1413 = vmatpush1.bf16.msra.mxu0 %v1021
  %1414 = vmatprep.subr.bf16.mxu0 0
  %1415 = vmatpush1.bf16.msra.mxu0 %v1022
  %1416 = vmatprep.subr.bf16.mxu0 0
  %1417 = vmatpush1.bf16.msra.mxu0 %v1023
  %1418 = vmatprep.subr.bf16.mxu0 0
  %1419 = vmatpush1.bf16.msra.mxu0 %v1024
  %1420 = vmatprep.subr.bf16.mxu0 0
  %1421 = vmatpush1.bf16.msra.mxu0 %v1025
  %1422 = vmatprep.subr.bf16.mxu0 0
  %1423 = vmatpush1.bf16.msra.mxu0 %v1026
  %1424 = vmatprep.subr.bf16.mxu0 0
  %1425 = vmatpush1.bf16.msra.mxu0 %v1027
  %1426 = vmatprep.subr.bf16.mxu0 0
  %1427 = vmatpush1.bf16.msra.mxu0 %v1028
  %1428 = vmatprep.subr.bf16.mxu0 0
  %1429 = vmatpush1.bf16.msra.mxu0 %v1029
  %1430 = vmatprep.mubr.bf16.mxu0 %v383
  %1431 = vmatmul.mubr.bf16.gmra.mrb[0].mxu0 %v382
  %v1432 = vpop.f32.mrb[0].mxu0
  %v1433 = vadd.f32 %v1385, %v1432
  %v1434 = vpop.f32.mrb[0].mxu0
  %v1435 = vpop.f32.mrb[0].mxu0
  %v1436 = vadd.f32 %v1388, %v1435
  %v1437 = vpop.f32.mrb[0].mxu0
  %1438 = vmatprep.mubr.bf16.mxu0 %v399
  %1439 = vmatmul.mubr.bf16.gmra.mrb[0].mxu0 %v398
  %v1440 = vpop.f32.mrb[0].mxu0
  %v1441 = vadd.f32 %v1393, %v1440
  %v1442 = vpop.f32.mrb[0].mxu0
  %v1443 = vpop.f32.mrb[0].mxu0
  %v1444 = vpop.f32.mrb[0].mxu0
  %1445 = vdwg.mxu0
  %1446 = vmatprep.subr.bf16.mxu0 0
  %1447 = vmatpush1.bf16.msra.mxu0 %v1030
  %1448 = vmatprep.subr.bf16.mxu0 0
  %1449 = vmatpush1.bf16.msra.mxu0 %v1031
  %1450 = vmatprep.subr.bf16.mxu0 0
  %1451 = vmatpush1.bf16.msra.mxu0 %v1032
  %1452 = vmatprep.subr.bf16.mxu0 0
  %1453 = vmatpush1.bf16.msra.mxu0 %v1033
  %1454 = vmatprep.subr.bf16.mxu0 0
  %1455 = vmatpush1.bf16.msra.mxu0 %v1034
  %1456 = vmatprep.subr.bf16.mxu0 0
  %1457 = vmatpush1.bf16.msra.mxu0 %v1035
  %1458 = vmatprep.subr.bf16.mxu0 0
  %1459 = vmatpush1.bf16.msra.mxu0 %v1036
  %1460 = vmatprep.subr.bf16.mxu0 0
  %1461 = vmatpush1.bf16.msra.mxu0 %v1037
  %1462 = vmatprep.subr.bf16.mxu0 0
  %1463 = vmatpush1.bf16.msra.mxu0 %v1038
  %1464 = vmatprep.subr.bf16.mxu0 0
  %1465 = vmatpush1.bf16.msra.mxu0 %v1039
  %1466 = vmatprep.subr.bf16.mxu0 0
  %1467 = vmatpush1.bf16.msra.mxu0 %v1040
  %1468 = vmatprep.subr.bf16.mxu0 0
  %1469 = vmatpush1.bf16.msra.mxu0 %v1041
  %1470 = vmatprep.subr.bf16.mxu0 0
  %1471 = vmatpush1.bf16.msra.mxu0 %v1042
  %1472 = vmatprep.subr.bf16.mxu0 0
  %1473 = vmatpush1.bf16.msra.mxu0 %v1043
  %1474 = vmatprep.subr.bf16.mxu0 0
  %1475 = vmatpush1.bf16.msra.mxu0 %v1044
  %1476 = vmatprep.subr.bf16.mxu0 0
  %1477 = vmatpush1.bf16.msra.mxu0 %v1045
  %1478 = vmatprep.mubr.bf16.mxu0 %v385
  %1479 = vmatmul.mubr.bf16.gmra.mrb[0].mxu0 %v384
  %v1480 = vpop.f32.mrb[0].mxu0
  %v1481 = vadd.f32 %v1433, %v1480
  %v1482 = vpop.f32.mrb[0].mxu0
  %v1483 = vpop.f32.mrb[0].mxu0
  %v1484 = vadd.f32 %v1436, %v1483
  %v1485 = vpop.f32.mrb[0].mxu0
  %1486 = vmatprep.mubr.bf16.mxu0 %v401
  %1487 = vmatmul.mubr.bf16.gmra.mrb[0].mxu0 %v400
  %v1488 = vpop.f32.mrb[0].mxu0
  %v1489 = vadd.f32 %v1441, %v1488
  %v1490 = vpop.f32.mrb[0].mxu0
  %v1491 = vpop.f32.mrb[0].mxu0
  %v1492 = vpop.f32.mrb[0].mxu0
  %1493 = vdwg.mxu0
  %1494 = vmatprep.subr.bf16.mxu0 0
  %1495 = vmatpush1.bf16.msra.mxu0 %v1046
  %1496 = vmatprep.subr.bf16.mxu0 0
  %1497 = vmatpush1.bf16.msra.mxu0 %v1047
  %1498 = vmatprep.subr.bf16.mxu0 0
  %1499 = vmatpush1.bf16.msra.mxu0 %v1048
  %1500 = vmatprep.subr.bf16.mxu0 0
  %1501 = vmatpush1.bf16.msra.mxu0 %v1049
  %1502 = vmatprep.subr.bf16.mxu0 0
  %1503 = vmatpush1.bf16.msra.mxu0 %v1050
  %1504 = vmatprep.subr.bf16.mxu0 0
  %1505 = vmatpush1.bf16.msra.mxu0 %v1051
  %1506 = vmatprep.subr.bf16.mxu0 0
  %1507 = vmatpush1.bf16.msra.mxu0 %v1052
  %1508 = vmatprep.subr.bf16.mxu0 0
  %1509 = vmatpush1.bf16.msra.mxu0 %v1053
  %1510 = vmatprep.subr.bf16.mxu0 0
  %1511 = vmatpush1.bf16.msra.mxu0 %v1054
  %1512 = vmatprep.subr.bf16.mxu0 0
  %1513 = vmatpush1.bf16.msra.mxu0 %v1055
  %1514 = vmatprep.subr.bf16.mxu0 0
  %1515 = vmatpush1.bf16.msra.mxu0 %v1056
  %1516 = vmatprep.subr.bf16.mxu0 0
  %1517 = vmatpush1.bf16.msra.mxu0 %v1057
  %1518 = vmatprep.subr.bf16.mxu0 0
  %1519 = vmatpush1.bf16.msra.mxu0 %v1058
  %1520 = vmatprep.subr.bf16.mxu0 0
  %1521 = vmatpush1.bf16.msra.mxu0 %v1059
  %1522 = vmatprep.subr.bf16.mxu0 0
  %1523 = vmatpush1.bf16.msra.mxu0 %v1060
  %1524 = vmatprep.subr.bf16.mxu0 0
  %1525 = vmatpush1.bf16.msra.mxu0 %v1061
  %1526 = vmatprep.mubr.bf16.mxu0 %v387
  %1527 = vmatmul.mubr.bf16.gmra.mrb[0].mxu0 %v386
  %v1528 = vpop.f32.mrb[0].mxu0
  %v1529 = vadd.f32 %v1481, %v1528
  %v1530 = vpop.f32.mrb[0].mxu0
  %v1531 = vpop.f32.mrb[0].mxu0
  %v1532 = vadd.f32 %v1484, %v1531
  %v1533 = vpop.f32.mrb[0].mxu0
  %1534 = vmatprep.mubr.bf16.mxu0 %v403
  %1535 = vmatmul.mubr.bf16.gmra.mrb[0].mxu0 %v402
  %v1536 = vpop.f32.mrb[0].mxu0
  %v1537 = vadd.f32 %v1489, %v1536
  %v1538 = vpop.f32.mrb[0].mxu0
  %v1539 = vpop.f32.mrb[0].mxu0
  %v1540 = vpop.f32.mrb[0].mxu0
  %1541 = vdwg.mxu0
  %1542 = vmatprep.subr.bf16.mxu0 0
  %1543 = vmatpush1.bf16.msra.mxu0 %v1062
  %1544 = vmatprep.subr.bf16.mxu0 0
  %1545 = vmatpush1.bf16.msra.mxu0 %v1063
  %1546 = vmatprep.subr.bf16.mxu0 0
  %1547 = vmatpush1.bf16.msra.mxu0 %v1064
  %1548 = vmatprep.subr.bf16.mxu0 0
  %1549 = vmatpush1.bf16.msra.mxu0 %v1065
  %1550 = vmatprep.subr.bf16.mxu0 0
  %1551 = vmatpush1.bf16.msra.mxu0 %v1066
  %1552 = vmatprep.subr.bf16.mxu0 0
  %1553 = vmatpush1.bf16.msra.mxu0 %v1067
  %1554 = vmatprep.subr.bf16.mxu0 0
  %1555 = vmatpush1.bf16.msra.mxu0 %v1068
  %1556 = vmatprep.subr.bf16.mxu0 0
  %1557 = vmatpush1.bf16.msra.mxu0 %v1069
  %1558 = vmatprep.subr.bf16.mxu0 0
  %1559 = vmatpush1.bf16.msra.mxu0 %v1070
  %1560 = vmatprep.subr.bf16.mxu0 0
  %1561 = vmatpush1.bf16.msra.mxu0 %v1071
  %1562 = vmatprep.subr.bf16.mxu0 0
  %1563 = vmatpush1.bf16.msra.mxu0 %v1072
  %1564 = vmatprep.subr.bf16.mxu0 0
  %1565 = vmatpush1.bf16.msra.mxu0 %v1073
  %1566 = vmatprep.subr.bf16.mxu0 0
  %1567 = vmatpush1.bf16.msra.mxu0 %v1074
  %1568 = vmatprep.subr.bf16.mxu0 0
  %1569 = vmatpush1.bf16.msra.mxu0 %v1075
  %1570 = vmatprep.subr.bf16.mxu0 0
  %1571 = vmatpush1.bf16.msra.mxu0 %v1076
  %1572 = vmatprep.subr.bf16.mxu0 0
  %1573 = vmatpush1.bf16.msra.mxu0 %v1077
  %1574 = vmatprep.mubr.bf16.mxu0 %v389
  %1575 = vmatmul.mubr.bf16.gmra.mrb[0].mxu0 %v388
  %v1576 = vpop.f32.mrb[0].mxu0
  %v1577 = vadd.f32 %v1529, %v1576
  %v1578 = vpop.f32.mrb[0].mxu0
  %v1579 = vpop.f32.mrb[0].mxu0
  %v1580 = vadd.f32 %v1532, %v1579
  %v1581 = vpop.f32.mrb[0].mxu0
  %1582 = vmatprep.mubr.bf16.mxu0 %v405
  %1583 = vmatmul.mubr.bf16.gmra.mrb[0].mxu0 %v404
  %v1584 = vpop.f32.mrb[0].mxu0
  %v1585 = vadd.f32 %v1537, %v1584
  %v1586 = vpop.f32.mrb[0].mxu0
  %v1587 = vpop.f32.mrb[0].mxu0
  %v1588 = vpop.f32.mrb[0].mxu0
  %1589 = vdwg.mxu0
  %v1590 = vmax.f32 %v1577, 0.0
  %v1591 = vmax.f32 %v1580, 0.0
  %v1592 = vmax.f32 %v1585, 0.0
  %v1593 = vpack.c.bf16 %v1591, %v1590
  %v1594 = vpack.c.bf16 %v1592, %v1592
  %v1597 = vunpack.c.l.b16 %v1593
  %v1598 = vunpack.c.h.b16 %v1593
  %v1599 = vunpack.c.l.b16 %v1594
  %v1600 = vpack.c.b16 %v1597, %v1597
  %v1601 = vpack.c.b16 %v1598, %v1598
  %v1602 = vpack.c.b16 %v1599, %v1599
  %1606 = vst [vmem:[%s3] sm:$0xf] %v1600
  %1607 = vst [vmem:[%s3 + $0x4] sm:$0xf] %v1601
  %1608 = vst [vmem:[%s3 + $0x8] sm:$0xf] %v1602
  // Predicated region
  $region14: #{conv_dqn_forward.5} parent=0 // pred_check
    _
  $region15: #{conv_dqn_forward.5} parent=0 // pred_check_branch
    %1610 = sbr.rel (0) target = $region17
  $region16: #{conv_dqn_forward.5} parent=0 // pred_region
    _
  $region17: #{conv_dqn_forward.5} parent=0 // pred_fallthru
    _
  // Predicated region
  $region18: #{conv_dqn_forward.5} parent=0 // pred_check
    _
  $region19: #{conv_dqn_forward.5} parent=0 // pred_check_branch
    %1612 = sbr.rel (0) target = $region21
  $region20: #{conv_dqn_forward.5} parent=0 // pred_region
    _
  $region21: #{conv_dqn_forward.5} parent=0 // pred_fallthru
    _

</llo_original>
